<compile_context>
chip_gen: v5e
topology: v5e:2x2
jax: 0.10.0
libtpu: 0.0.40
codegen_flags: <defaults>
</compile_context>

<pallas_src>
import math

import jax
import jax.numpy as jnp
from jax import lax
from jax.experimental import pallas as pl
from jax.experimental.pallas import tpu as pltpu


# ----------------------------------------------------------------------------
# Fused per-level kernel factory
# ----------------------------------------------------------------------------
def _make_level_kernel(*, H, W, Cout, M, Hq, Wq, has_topdown, emit_lateral,
                       compute_dtype):
    HW = H * W
    f32 = jnp.float32

    def kernel(*refs):
        if has_topdown:
            x_ref, lw_ref, lb_ref, ow_ref, ob_ref, prev_ref = refs[:6]
            refs = refs[6:]
        else:
            x_ref, lw_ref, lb_ref, ow_ref, ob_ref = refs[:5]
            prev_ref = None
            refs = refs[5:]
        if emit_lateral:
            out_ref, lat_ref, pad_ref = refs
        else:
            out_ref, pad_ref = refs
            lat_ref = None

        # ---- lateral 1x1 conv: (HW, Cin) @ (Cin, Cout) + bias --------------
        lat = jnp.dot(x_ref[0], lw_ref[...], preferred_element_type=f32)
        lat = lat + lb_ref[...].astype(f32)

        # ---- stage into the row-padded VMEM scratch ------------------------
        pad_ref[pl.ds(0, M), :] = jnp.zeros((M, Cout), f32)
        pad_ref[pl.ds(M + HW, M), :] = jnp.zeros((M, Cout), f32)
        pad_ref[pl.ds(M, HW), :] = lat

        # ---- fused top-down 2x nearest upsample + add (fuse_type='sum') ----
        if has_topdown:
            r_idx = lax.broadcasted_iota(jnp.int32, (2 * W, Wq), 0)
            k_idx = lax.broadcasted_iota(jnp.int32, (2 * W, Wq), 1)
            # e2 @ coarse_row -> the two fine rows (each coarse pixel repeated
            # twice along W, the whole row repeated twice along H).
            e2 = (((r_idx % W) // 2) == k_idx).astype(f32)        # (2W, Wq)

            def td_body(i2, carry):
                pr = prev_ref[0, pl.ds(i2 * Wq, Wq), :].astype(f32)   # (Wq, C)
                up2 = jnp.dot(e2, pr, preferred_element_type=f32)     # (2W, C)
                pad_ref[pl.ds(M + i2 * (2 * W), 2 * W), :] += up2
                return carry

            lax.fori_loop(0, Hq, td_body, 0)

        # ---- hand the fused lateral to the next (higher-res) level ---------
        if emit_lateral:
            lat_ref[0] = pad_ref[pl.ds(M, HW), :].astype(lat_ref.dtype)

        # ---- 3x3 output conv: 9 shifted-slice MXU matmuls, f32 accum -------
        col = lax.broadcasted_iota(jnp.int32, (HW, 1), 0) % W
        acc = jnp.zeros((HW, Cout), f32)
        for t in range(9):
            dh, dw = t // 3 - 1, t % 3 - 1
            tap = pad_ref[pl.ds(M + dh * W + dw, HW), :]
            if dw == -1:      # contribution wrapping past column 0 is padding
                tap = jnp.where(col > 0, tap, 0.0)
            elif dw == 1:     # contribution wrapping past column W-1 is padding
                tap = jnp.where(col < W - 1, tap, 0.0)
            acc = acc + jnp.dot(tap.astype(compute_dtype), ow_ref[t],
                                preferred_element_type=f32)

        out = jnp.maximum(acc + ob_ref[...].astype(f32), 0.0)    # bias + ReLU
        out_ref[0] = out.T.astype(out_ref.dtype)                 # NCHW block

    return kernel


# ----------------------------------------------------------------------------
# Per-level pallas_call wrapper
# ----------------------------------------------------------------------------
def _fpn_level(x, lw, lb, ow9, ob, prev, *, H, W, out_channels, emit_lateral,
               compute_dtype):
    B, HW, Cin = x.shape
    Cout = out_channels
    assert HW == H * W
    has_topdown = prev is not None
    M = W + 8                                  # top/bottom zero margin (>= W+1)
    if has_topdown:
        Hq, Wq = H // 2, W // 2
        assert prev.shape == (B, Hq * Wq, Cout), prev.shape
    else:
        Hq = Wq = 0

    kernel = _make_level_kernel(H=H, W=W, Cout=Cout, M=M, Hq=Hq, Wq=Wq,
                                has_topdown=has_topdown,
                                emit_lateral=emit_lateral,
                                compute_dtype=compute_dtype)

    in_specs = [
        pl.BlockSpec((1, HW, Cin), lambda i: (i, 0, 0)),
        pl.BlockSpec((Cin, Cout), lambda i: (0, 0)),
        pl.BlockSpec((1, Cout), lambda i: (0, 0)),
        pl.BlockSpec((9, Cout, Cout), lambda i: (0, 0, 0)),
        pl.BlockSpec((1, Cout), lambda i: (0, 0)),
    ]
    inputs = [x, lw, lb, ow9, ob]
    if has_topdown:
        in_specs.append(pl.BlockSpec((1, Hq * Wq, Cout), lambda i: (i, 0, 0)))
        inputs.append(prev)

    out_spec_main = pl.BlockSpec((1, Cout, HW), lambda i: (i, 0, 0))
    out_shape_main = jax.ShapeDtypeStruct((B, Cout, HW), jnp.float32)
    if emit_lateral:
        out_shape = (out_shape_main,
                     jax.ShapeDtypeStruct((B, HW, Cout), compute_dtype))
        out_specs = (out_spec_main,
                     pl.BlockSpec((1, HW, Cout), lambda i: (i, 0, 0)))
    else:
        out_shape = out_shape_main
        out_specs = out_spec_main

    res = pl.pallas_call(
        kernel,
        grid=(B,),
        in_specs=in_specs,
        out_specs=out_specs,
        out_shape=out_shape,
        scratch_shapes=[pltpu.VMEM((HW + 2 * M, Cout), jnp.float32)],
        compiler_params=pltpu.CompilerParams(
            dimension_semantics=("parallel",),
            vmem_limit_bytes=32 * 1024 * 1024),
    )(*inputs)

    if emit_lateral:
        out_flat, lat = res
    else:
        out_flat, lat = res, None
    return out_flat, lat


# ----------------------------------------------------------------------------
# FPN forward (Pallas)
# ----------------------------------------------------------------------------
def fpn_forward(backbone_features, params, out_channels, *,
                compute_dtype=jnp.float32):
    """backbone_features: list of (B, H*W, Cin_i) arrays, low -> high resolution
    (the order the PyTorch module consumes them after reversing its conv lists).
    Returns a list of NCHW (B, out_channels, H_i, W_i) arrays."""
    n_levels = len(backbone_features)
    results = []
    prev = None                                # fused lateral of coarser level
    for idx, feat in enumerate(backbone_features):
        B, HW, _ = feat.shape
        H = W = int(round(math.sqrt(HW)))      # module assumes square maps
        lw, lb = params["lateral"][idx]
        ow, ob = params["output"][idx]
        out_flat, prev = _fpn_level(
            feat.astype(compute_dtype),
            lw.astype(compute_dtype), lb,
            ow.reshape(9, out_channels, out_channels).astype(compute_dtype), ob,
            prev,
            H=H, W=W, out_channels=out_channels,
            emit_lateral=(idx < n_levels - 1),
            compute_dtype=compute_dtype)
        results.append(out_flat.reshape(B, out_channels, H, W))
    # TODO(synk): top_block (extra pyramid levels), fuse_type='avg' and the
    # out_as_input=True branch (bilinear upsample + GELU) are not implemented;
    # the module defaults used here do not exercise them.
    return results


# ----------------------------------------------------------------------------
# Parameter init (deterministic, mirrors FPN._init_weights: xavier_uniform, b=0)
# ----------------------------------------------------------------------------
def _assert_strides_are_log2_contiguous(strides):
    for i, stride in enumerate(strides[1:], 1):
        assert stride == 2 * strides[i - 1], (stride, strides[i - 1])


def _xavier_uniform(key, shape, fan_in, fan_out):
    a = math.sqrt(6.0 / (fan_in + fan_out))
    return jax.random.uniform(key, shape, jnp.float32, -a, a)


def init_fpn_params(key, input_channels_stride, out_channels):
    """Params in processing order (low res -> high res), matching FPN.__init__
    which reverses lateral_convs / output_convs."""
    _assert_strides_are_log2_contiguous([f[1] for f in input_channels_stride])
    in_channels_per_feature = [f[0] for f in input_channels_stride]
    proc_in_channels = in_channels_per_feature[::-1]

    laterals, outputs = [], []
    for cin in proc_in_channels:
        key, k1, k2 = jax.random.split(key, 3)
        lw = _xavier_uniform(k1, (cin, out_channels), cin, out_channels)
        lb = jnp.zeros((1, out_channels), jnp.float32)
        ow = _xavier_uniform(k2, (3, 3, out_channels, out_channels),
                             out_channels * 9, out_channels * 9)
        ob = jnp.zeros((1, out_channels), jnp.float32)
        laterals.append((lw, lb))
        outputs.append((ow, ob))
    return {"lateral": laterals, "output": outputs}


# ----------------------------------------------------------------------------
# Pure-JAX reference (mirrors the kernel's dtype handling for the comparison)
# ----------------------------------------------------------------------------
def _upsample_nearest_2x(x):
    return jnp.repeat(jnp.repeat(x, 2, axis=1), 2, axis=2)


def fpn_reference(backbone_features, params, out_channels,
                  compute_dtype=jnp.float32):
    prec = lax.Precision.HIGHEST
    results = []
    prev = None
    for idx, feat in enumerate(backbone_features):
        B, HW, _ = feat.shape
        H = W = int(round(math.sqrt(HW)))
        lw, lb = params["lateral"][idx]
        lat = jnp.einsum("bnc,co->bno", feat.astype(compute_dtype),
                         lw.astype(compute_dtype),
                         preferred_element_type=jnp.float32,
                         precision=prec) + lb
        lat = lat.reshape(B, H, W, out_channels)
        if idx > 0:
            lat = lat + _upsample_nearest_2x(prev.astype(jnp.float32))
        prev = lat.astype(compute_dtype)       # what the kernel hands onward
        ow, ob = params["output"][idx]
        conv = lax.conv_general_dilated(
            lat.astype(compute_dtype), ow.astype(compute_dtype),
            window_strides=(1, 1), padding="SAME",
            dimension_numbers=("NHWC", "HWIO", "NHWC"),
            preferred_element_type=jnp.float32, precision=prec)
        conv = jax.nn.relu(conv + ob.reshape(1, 1, 1, out_channels))
        results.append(conv.transpose(0, 3, 1, 2))
    return results


# ----------------------------------------------------------------------------
if __name__ == "__main__":
    key = jax.random.PRNGKey(0)

    # Two pyramid levels, strides (4, 8) -> log2 contiguous. out_channels is a
    # multiple of 128 so every kernel output block is lane-dense.
    input_channels_stride = [(32, 4), (64, 8)]   # (in_channels, stride), hi->lo
    out_channels = 128
    B = 2

    # Features in the order the forward consumes them (low -> high resolution):
    #   level 0: stride 8, 8x8 spatial, 64 ch ; level 1: stride 4, 16x16, 32 ch.
    key, k0, k1, kp = jax.random.split(key, 4)
    backbone_features = [
        jax.random.normal(k0, (B, 8 * 8, 64), jnp.float32),
        jax.random.normal(k1, (B, 16 * 16, 32), jnp.float32),
    ]
    params = init_fpn_params(kp, input_channels_stride, out_channels)

    # --- float32 run (faithful to the PyTorch module) ------------------------
    outs = fpn_forward(backbone_features, params, out_channels,
                       compute_dtype=jnp.float32)
    outs = [jax.block_until_ready(o) for o in outs]
    refs = fpn_reference(backbone_features, params, out_channels,
                         compute_dtype=jnp.float32)
    refs = [jax.block_until_ready(r) for r in refs]
    for o, r in zip(outs, refs):
        assert o.shape == r.shape, (o.shape, r.shape)
        assert jnp.allclose(o, r, rtol=5e-3, atol=5e-3), "f32 mismatch vs ref"

    # --- bfloat16-operand run (v6e/v5e MXU feedback): bf16 in, f32 accum -----
    outs16 = fpn_forward(backbone_features, params, out_channels,
                         compute_dtype=jnp.bfloat16)
    outs16 = [jax.block_until_ready(o) for o in outs16]
    refs16 = fpn_reference(backbone_features, params, out_channels,
                           compute_dtype=jnp.bfloat16)
    refs16 = [jax.block_until_ready(r) for r in refs16]
    for o, r in zip(outs16, refs16):
        assert o.shape == r.shape, (o.shape, r.shape)
        assert jnp.allclose(o, r, rtol=3e-2, atol=3e-2), "bf16 mismatch vs ref"

    print("KERNEL_OK")
</pallas_src>

<mosaic_0001>
module attributes {stable_mosaic.version = 11 : i64} {
  func.func @kernel(%arg0: i32, %arg1: memref<1x64x64xf32, #tpu.memory_space<vmem>>, %arg2: memref<64x128xf32, #tpu.memory_space<vmem>>, %arg3: memref<1x128xf32, #tpu.memory_space<vmem>>, %arg4: memref<9x128x128xf32, #tpu.memory_space<vmem>>, %arg5: memref<1x128xf32, #tpu.memory_space<vmem>>, %arg6: memref<1x128x64xf32, #tpu.memory_space<vmem>>, %arg7: memref<1x64x128xf32, #tpu.memory_space<vmem>>, %arg8: memref<96x128xf32, #tpu.memory_space<vmem>>) attributes {dimension_semantics = [#tpu.dimension_semantics<parallel>], iteration_bounds = array<i64: 2>, scalar_prefetch = 0 : i64, scratch_operands = 1 : i64, tpu.core_type = #tpu.core_type<tc>, window_params = [{transform_indices = @transform_0, window_bounds = array<i64: 1, 64, 64>}, {pipeline_mode = #tpu.pipeline_mode<synchronous>, transform_indices = @transform_1, window_bounds = array<i64: 64, 128>}, {pipeline_mode = #tpu.pipeline_mode<synchronous>, transform_indices = @transform_2, window_bounds = array<i64: 1, 128>}, {pipeline_mode = #tpu.pipeline_mode<synchronous>, transform_indices = @transform_3, window_bounds = array<i64: 9, 128, 128>}, {pipeline_mode = #tpu.pipeline_mode<synchronous>, transform_indices = @transform_4, window_bounds = array<i64: 1, 128>}, {transform_indices = @transform_5, window_bounds = array<i64: 1, 128, 64>}, {transform_indices = @transform_6, window_bounds = array<i64: 1, 64, 128>}]} {
    %c0 = arith.constant 0 : index
    %c0_0 = arith.constant 0 : index
    %c0_1 = arith.constant 0 : index
    %0 = vector.load %arg1[%c0, %c0_0, %c0_1] : memref<1x64x64xf32, #tpu.memory_space<vmem>>, vector<1x64x64xf32>
    %1 = vector.shape_cast %0 : vector<1x64x64xf32> to vector<64x64xf32>
    %c0_2 = arith.constant 0 : index
    %c0_3 = arith.constant 0 : index
    %2 = vector.load %arg2[%c0_2, %c0_3] : memref<64x128xf32, #tpu.memory_space<vmem>>, vector<64x128xf32>
    %cst = arith.constant dense<0.000000e+00> : vector<64x128xf32>
    %3 = tpu.matmul %1, %2, %cst {dimension_numbers = #tpu.dot_dimension_numbers<[1], [0], [0], [1], [0, 0, 1, 1], [], []>} : vector<64x64xf32>, vector<64x128xf32>, vector<64x128xf32> -> vector<64x128xf32>
    %c0_4 = arith.constant 0 : index
    %c0_5 = arith.constant 0 : index
    %4 = vector.load %arg3[%c0_4, %c0_5] : memref<1x128xf32, #tpu.memory_space<vmem>>, vector<1x128xf32>
    %5 = vector.broadcast %4 : vector<1x128xf32> to vector<64x128xf32>
    %6 = arith.addf %3, %5 : vector<64x128xf32>
    %cst_6 = arith.constant 0.000000e+00 : f32
    %7 = vector.broadcast %cst_6 : f32 to vector<16x128xf32>
    %c0_7 = arith.constant 0 : index
    %c0_8 = arith.constant 0 : index
    %8 = vector.load %arg8[%c0_7, %c0_8] : memref<96x128xf32, #tpu.memory_space<vmem>>, vector<16x128xf32>
    tpu.vector_store %arg8[%c0_7, %c0_8], %7 {strides = array<i32>} : memref<96x128xf32, #tpu.memory_space<vmem>>, vector<16x128xf32>,
    %cst_9 = arith.constant 0.000000e+00 : f32
    %9 = vector.broadcast %cst_9 : f32 to vector<16x128xf32>
    %c80 = arith.constant 80 : index
    %c0_10 = arith.constant 0 : index
    %10 = vector.load %arg8[%c80, %c0_10] : memref<96x128xf32, #tpu.memory_space<vmem>>, vector<16x128xf32>
    tpu.vector_store %arg8[%c80, %c0_10], %9 {strides = array<i32>} : memref<96x128xf32, #tpu.memory_space<vmem>>, vector<16x128xf32>,
    %c16 = arith.constant 16 : index
    %c0_11 = arith.constant 0 : index
    %11 = vector.load %arg8[%c16, %c0_11] : memref<96x128xf32, #tpu.memory_space<vmem>>, vector<64x128xf32>
    tpu.vector_store %arg8[%c16, %c0_11], %6 {strides = array<i32>} : memref<96x128xf32, #tpu.memory_space<vmem>>, vector<64x128xf32>,
    %c16_12 = arith.constant 16 : index
    %c0_13 = arith.constant 0 : index
    %12 = vector.load %arg8[%c16_12, %c0_13] : memref<96x128xf32, #tpu.memory_space<vmem>>, vector<64x128xf32>
    %c0_14 = arith.constant 0 : index
    %c0_15 = arith.constant 0 : index
    %c0_16 = arith.constant 0 : index
    %13 = vector.load %arg7[%c0_14, %c0_15, %c0_16] : memref<1x64x128xf32, #tpu.memory_space<vmem>>, vector<1x64x128xf32>
    %14 = vector.shape_cast %13 : vector<1x64x128xf32> to vector<64x128xf32>
    %15 = vector.shape_cast %12 : vector<64x128xf32> to vector<1x64x128xf32>
    tpu.vector_store %arg7[%c0_14, %c0_15, %c0_16], %15 {strides = array<i32>} : memref<1x64x128xf32, #tpu.memory_space<vmem>>, vector<1x64x128xf32>,
    %16 = tpu.iota {dimensions = array<i32: 0>} : vector<64x1xi32>
    %c8_i32 = arith.constant 8 : i32
    %c0_i32 = arith.constant 0 : i32
    %17 = arith.cmpi eq, %c8_i32, %c0_i32 : i32
    %c1_i32 = arith.constant 1 : i32
    %18 = arith.select %17, %c1_i32, %c8_i32 : i32
    %19 = vector.broadcast %18 : i32 to vector<64x1xi32>
    %20 = arith.remsi %16, %19 : vector<64x1xi32>
    %c0_i32_17 = arith.constant 0 : i32
    %21 = vector.broadcast %c0_i32_17 : i32 to vector<64x1xi32>
    %22 = arith.cmpi ne, %20, %21 : vector<64x1xi32>
    %c0_i32_18 = arith.constant 0 : i32
    %23 = vector.broadcast %c0_i32_18 : i32 to vector<64x1xi32>
    %24 = arith.cmpi slt, %20, %23 : vector<64x1xi32>
    %c0_i32_19 = arith.constant 0 : i32
    %25 = arith.cmpi slt, %18, %c0_i32_19 : i32
    %26 = vector.broadcast %25 : i1 to vector<64x1xi1>
    %27 = vector.broadcast %26 : vector<64x1xi1> to vector<64x1xi1>
    %28 = arith.xori %24, %27 : vector<64x1xi1>
    %29 = arith.andi %28, %22 : vector<64x1xi1>
    %30 = vector.broadcast %18 : i32 to vector<64x1xi32>
    %31 = arith.addi %20, %30 : vector<64x1xi32>
    %32 = arith.select %29, %31, %20 : vector<64x1xi1>, vector<64x1xi32>
    %cst_20 = arith.constant 0.000000e+00 : f32
    %33 = vector.broadcast %cst_20 : f32 to vector<64x128xf32>
    %c7 = arith.constant 7 : index
    %c0_21 = arith.constant 0 : index
    %34 = vector.load %arg8[%c7, %c0_21] : memref<96x128xf32, #tpu.memory_space<vmem>>, vector<64x128xf32>
    %c0_i32_22 = arith.constant 0 : i32
    %35 = vector.broadcast %c0_i32_22 : i32 to vector<64x1xi32>
    %36 = arith.cmpi sgt, %32, %35 : vector<64x1xi32>
    %cst_23 = arith.constant 0.000000e+00 : f32
    %37 = vector.shape_cast %36 : vector<64x1xi1> to vector<64x1xi1>
    %38 = vector.broadcast %37 : vector<64x1xi1> to vector<64x128xi1>
    %39 = vector.broadcast %cst_23 : f32 to vector<64x128xf32>
    %40 = arith.select %38, %34, %39 : vector<64x128xi1>, vector<64x128xf32>
    %c0_24 = arith.constant 0 : index
    %c0_25 = arith.constant 0 : index
    %c0_26 = arith.constant 0 : index
    %41 = vector.load %arg4[%c0_24, %c0_25, %c0_26] : memref<9x128x128xf32, #tpu.memory_space<vmem>>, vector<1x128x128xf32>
    %42 = vector.shape_cast %41 : vector<1x128x128xf32> to vector<128x128xf32>
    %cst_27 = arith.constant dense<0.000000e+00> : vector<64x128xf32>
    %43 = tpu.matmul %40, %42, %cst_27 {dimension_numbers = #tpu.dot_dimension_numbers<[1], [0], [0], [1], [0, 0, 1, 1], [], []>} : vector<64x128xf32>, vector<128x128xf32>, vector<64x128xf32> -> vector<64x128xf32>
    %44 = arith.addf %33, %43 : vector<64x128xf32>
    %c8 = arith.constant 8 : index
    %c0_28 = arith.constant 0 : index
    %45 = vector.load %arg8[%c8, %c0_28] : memref<96x128xf32, #tpu.memory_space<vmem>>, vector<64x128xf32>
    %c1 = arith.constant 1 : index
    %c0_29 = arith.constant 0 : index
    %c0_30 = arith.constant 0 : index
    %46 = vector.load %arg4[%c1, %c0_29, %c0_30] : memref<9x128x128xf32, #tpu.memory_space<vmem>>, vector<1x128x128xf32>
    %47 = vector.shape_cast %46 : vector<1x128x128xf32> to vector<128x128xf32>
    %cst_31 = arith.constant dense<0.000000e+00> : vector<64x128xf32>
    %48 = tpu.matmul %45, %47, %cst_31 {dimension_numbers = #tpu.dot_dimension_numbers<[1], [0], [0], [1], [0, 0, 1, 1], [], []>} : vector<64x128xf32>, vector<128x128xf32>, vector<64x128xf32> -> vector<64x128xf32>
    %49 = arith.addf %44, %48 : vector<64x128xf32>
    %c9 = arith.constant 9 : index
    %c0_32 = arith.constant 0 : index
    %50 = vector.load %arg8[%c9, %c0_32] : memref<96x128xf32, #tpu.memory_space<vmem>>, vector<64x128xf32>
    %c7_i32 = arith.constant 7 : i32
    %51 = vector.broadcast %c7_i32 : i32 to vector<64x1xi32>
    %52 = arith.cmpi slt, %32, %51 : vector<64x1xi32>
    %cst_33 = arith.constant 0.000000e+00 : f32
    %53 = vector.shape_cast %52 : vector<64x1xi1> to vector<64x1xi1>
    %54 = vector.broadcast %53 : vector<64x1xi1> to vector<64x128xi1>
    %55 = vector.broadcast %cst_33 : f32 to vector<64x128xf32>
    %56 = arith.select %54, %50, %55 : vector<64x128xi1>, vector<64x128xf32>
    %c2 = arith.constant 2 : index
    %c0_34 = arith.constant 0 : index
    %c0_35 = arith.constant 0 : index
    %57 = vector.load %arg4[%c2, %c0_34, %c0_35] : memref<9x128x128xf32, #tpu.memory_space<vmem>>, vector<1x128x128xf32>
    %58 = vector.shape_cast %57 : vector<1x128x128xf32> to vector<128x128xf32>
    %cst_36 = arith.constant dense<0.000000e+00> : vector<64x128xf32>
    %59 = tpu.matmul %56, %58, %cst_36 {dimension_numbers = #tpu.dot_dimension_numbers<[1], [0], [0], [1], [0, 0, 1, 1], [], []>} : vector<64x128xf32>, vector<128x128xf32>, vector<64x128xf32> -> vector<64x128xf32>
    %60 = arith.addf %49, %59 : vector<64x128xf32>
    %c15 = arith.constant 15 : index
    %c0_37 = arith.constant 0 : index
    %61 = vector.load %arg8[%c15, %c0_37] : memref<96x128xf32, #tpu.memory_space<vmem>>, vector<64x128xf32>
    %c0_i32_38 = arith.constant 0 : i32
    %62 = vector.broadcast %c0_i32_38 : i32 to vector<64x1xi32>
    %63 = arith.cmpi sgt, %32, %62 : vector<64x1xi32>
    %cst_39 = arith.constant 0.000000e+00 : f32
    %64 = vector.shape_cast %63 : vector<64x1xi1> to vector<64x1xi1>
    %65 = vector.broadcast %64 : vector<64x1xi1> to vector<64x128xi1>
    %66 = vector.broadcast %cst_39 : f32 to vector<64x128xf32>
    %67 = arith.select %65, %61, %66 : vector<64x128xi1>, vector<64x128xf32>
    %c3 = arith.constant 3 : index
    %c0_40 = arith.constant 0 : index
    %c0_41 = arith.constant 0 : index
    %68 = vector.load %arg4[%c3, %c0_40, %c0_41] : memref<9x128x128xf32, #tpu.memory_space<vmem>>, vector<1x128x128xf32>
    %69 = vector.shape_cast %68 : vector<1x128x128xf32> to vector<128x128xf32>
    %cst_42 = arith.constant dense<0.000000e+00> : vector<64x128xf32>
    %70 = tpu.matmul %67, %69, %cst_42 {dimension_numbers = #tpu.dot_dimension_numbers<[1], [0], [0], [1], [0, 0, 1, 1], [], []>} : vector<64x128xf32>, vector<128x128xf32>, vector<64x128xf32> -> vector<64x128xf32>
    %71 = arith.addf %60, %70 : vector<64x128xf32>
    %c16_43 = arith.constant 16 : index
    %c0_44 = arith.constant 0 : index
    %72 = vector.load %arg8[%c16_43, %c0_44] : memref<96x128xf32, #tpu.memory_space<vmem>>, vector<64x128xf32>
    %c4 = arith.constant 4 : index
    %c0_45 = arith.constant 0 : index
    %c0_46 = arith.constant 0 : index
    %73 = vector.load %arg4[%c4, %c0_45, %c0_46] : memref<9x128x128xf32, #tpu.memory_space<vmem>>, vector<1x128x128xf32>
    %74 = vector.shape_cast %73 : vector<1x128x128xf32> to vector<128x128xf32>
    %cst_47 = arith.constant dense<0.000000e+00> : vector<64x128xf32>
    %75 = tpu.matmul %72, %74, %cst_47 {dimension_numbers = #tpu.dot_dimension_numbers<[1], [0], [0], [1], [0, 0, 1, 1], [], []>} : vector<64x128xf32>, vector<128x128xf32>, vector<64x128xf32> -> vector<64x128xf32>
    %76 = arith.addf %71, %75 : vector<64x128xf32>
    %c17 = arith.constant 17 : index
    %c0_48 = arith.constant 0 : index
    %77 = vector.load %arg8[%c17, %c0_48] : memref<96x128xf32, #tpu.memory_space<vmem>>, vector<64x128xf32>
    %c7_i32_49 = arith.constant 7 : i32
    %78 = vector.broadcast %c7_i32_49 : i32 to vector<64x1xi32>
    %79 = arith.cmpi slt, %32, %78 : vector<64x1xi32>
    %cst_50 = arith.constant 0.000000e+00 : f32
    %80 = vector.shape_cast %79 : vector<64x1xi1> to vector<64x1xi1>
    %81 = vector.broadcast %80 : vector<64x1xi1> to vector<64x128xi1>
    %82 = vector.broadcast %cst_50 : f32 to vector<64x128xf32>
    %83 = arith.select %81, %77, %82 : vector<64x128xi1>, vector<64x128xf32>
    %c5 = arith.constant 5 : index
    %c0_51 = arith.constant 0 : index
    %c0_52 = arith.constant 0 : index
    %84 = vector.load %arg4[%c5, %c0_51, %c0_52] : memref<9x128x128xf32, #tpu.memory_space<vmem>>, vector<1x128x128xf32>
    %85 = vector.shape_cast %84 : vector<1x128x128xf32> to vector<128x128xf32>
    %cst_53 = arith.constant dense<0.000000e+00> : vector<64x128xf32>
    %86 = tpu.matmul %83, %85, %cst_53 {dimension_numbers = #tpu.dot_dimension_numbers<[1], [0], [0], [1], [0, 0, 1, 1], [], []>} : vector<64x128xf32>, vector<128x128xf32>, vector<64x128xf32> -> vector<64x128xf32>
    %87 = arith.addf %76, %86 : vector<64x128xf32>
    %c23 = arith.constant 23 : index
    %c0_54 = arith.constant 0 : index
    %88 = vector.load %arg8[%c23, %c0_54] : memref<96x128xf32, #tpu.memory_space<vmem>>, vector<64x128xf32>
    %c0_i32_55 = arith.constant 0 : i32
    %89 = vector.broadcast %c0_i32_55 : i32 to vector<64x1xi32>
    %90 = arith.cmpi sgt, %32, %89 : vector<64x1xi32>
    %cst_56 = arith.constant 0.000000e+00 : f32
    %91 = vector.shape_cast %90 : vector<64x1xi1> to vector<64x1xi1>
    %92 = vector.broadcast %91 : vector<64x1xi1> to vector<64x128xi1>
    %93 = vector.broadcast %cst_56 : f32 to vector<64x128xf32>
    %94 = arith.select %92, %88, %93 : vector<64x128xi1>, vector<64x128xf32>
    %c6 = arith.constant 6 : index
    %c0_57 = arith.constant 0 : index
    %c0_58 = arith.constant 0 : index
    %95 = vector.load %arg4[%c6, %c0_57, %c0_58] : memref<9x128x128xf32, #tpu.memory_space<vmem>>, vector<1x128x128xf32>
    %96 = vector.shape_cast %95 : vector<1x128x128xf32> to vector<128x128xf32>
    %cst_59 = arith.constant dense<0.000000e+00> : vector<64x128xf32>
    %97 = tpu.matmul %94, %96, %cst_59 {dimension_numbers = #tpu.dot_dimension_numbers<[1], [0], [0], [1], [0, 0, 1, 1], [], []>} : vector<64x128xf32>, vector<128x128xf32>, vector<64x128xf32> -> vector<64x128xf32>
    %98 = arith.addf %87, %97 : vector<64x128xf32>
    %c24 = arith.constant 24 : index
    %c0_60 = arith.constant 0 : index
    %99 = vector.load %arg8[%c24, %c0_60] : memref<96x128xf32, #tpu.memory_space<vmem>>, vector<64x128xf32>
    %c7_61 = arith.constant 7 : index
    %c0_62 = arith.constant 0 : index
    %c0_63 = arith.constant 0 : index
    %100 = vector.load %arg4[%c7_61, %c0_62, %c0_63] : memref<9x128x128xf32, #tpu.memory_space<vmem>>, vector<1x128x128xf32>
    %101 = vector.shape_cast %100 : vector<1x128x128xf32> to vector<128x128xf32>
    %cst_64 = arith.constant dense<0.000000e+00> : vector<64x128xf32>
    %102 = tpu.matmul %99, %101, %cst_64 {dimension_numbers = #tpu.dot_dimension_numbers<[1], [0], [0], [1], [0, 0, 1, 1], [], []>} : vector<64x128xf32>, vector<128x128xf32>, vector<64x128xf32> -> vector<64x128xf32>
    %103 = arith.addf %98, %102 : vector<64x128xf32>
    %c25 = arith.constant 25 : index
    %c0_65 = arith.constant 0 : index
    %104 = vector.load %arg8[%c25, %c0_65] : memref<96x128xf32, #tpu.memory_space<vmem>>, vector<64x128xf32>
    %c7_i32_66 = arith.constant 7 : i32
    %105 = vector.broadcast %c7_i32_66 : i32 to vector<64x1xi32>
    %106 = arith.cmpi slt, %32, %105 : vector<64x1xi32>
    %cst_67 = arith.constant 0.000000e+00 : f32
    %107 = vector.shape_cast %106 : vector<64x1xi1> to vector<64x1xi1>
    %108 = vector.broadcast %107 : vector<64x1xi1> to vector<64x128xi1>
    %109 = vector.broadcast %cst_67 : f32 to vector<64x128xf32>
    %110 = arith.select %108, %104, %109 : vector<64x128xi1>, vector<64x128xf32>
    %c8_68 = arith.constant 8 : index
    %c0_69 = arith.constant 0 : index
    %c0_70 = arith.constant 0 : index
    %111 = vector.load %arg4[%c8_68, %c0_69, %c0_70] : memref<9x128x128xf32, #tpu.memory_space<vmem>>, vector<1x128x128xf32>
    %112 = vector.shape_cast %111 : vector<1x128x128xf32> to vector<128x128xf32>
    %cst_71 = arith.constant dense<0.000000e+00> : vector<64x128xf32>
    %113 = tpu.matmul %110, %112, %cst_71 {dimension_numbers = #tpu.dot_dimension_numbers<[1], [0], [0], [1], [0, 0, 1, 1], [], []>} : vector<64x128xf32>, vector<128x128xf32>, vector<64x128xf32> -> vector<64x128xf32>
    %114 = arith.addf %103, %113 : vector<64x128xf32>
    %c0_72 = arith.constant 0 : index
    %c0_73 = arith.constant 0 : index
    %115 = vector.load %arg5[%c0_72, %c0_73] : memref<1x128xf32, #tpu.memory_space<vmem>>, vector<1x128xf32>
    %116 = vector.broadcast %115 : vector<1x128xf32> to vector<64x128xf32>
    %117 = arith.addf %114, %116 : vector<64x128xf32>
    %cst_74 = arith.constant 0.000000e+00 : f32
    %118 = vector.broadcast %cst_74 : f32 to vector<64x128xf32>
    %119 = arith.maximumf %117, %118 : vector<64x128xf32>
    %120 = tpu.transpose %119, [1, 0] : vector<64x128xf32> -> vector<128x64xf32>
    %c0_75 = arith.constant 0 : index
    %c0_76 = arith.constant 0 : index
    %c0_77 = arith.constant 0 : index
    %121 = vector.load %arg6[%c0_75, %c0_76, %c0_77] : memref<1x128x64xf32, #tpu.memory_space<vmem>>, vector<1x128x64xf32>
    %122 = vector.shape_cast %121 : vector<1x128x64xf32> to vector<128x64xf32>
    %123 = vector.shape_cast %120 : vector<128x64xf32> to vector<1x128x64xf32>
    tpu.vector_store %arg6[%c0_75, %c0_76, %c0_77], %123 {strides = array<i32>} : memref<1x128x64xf32, #tpu.memory_space<vmem>>, vector<1x128x64xf32>,
    return
  }
  func.func @transform_0(%arg0: i32) -> (i32, i32, i32) {
    %c0_i32 = arith.constant 0 : i32
    %c0_i32_0 = arith.constant 0 : i32
    %c0_i32_1 = arith.constant 0 : i32
    return %arg0, %c0_i32, %c0_i32_0 : i32, i32, i32
  }
  func.func @transform_1(%arg0: i32) -> (i32, i32) {
    %c0_i32 = arith.constant 0 : i32
    %c0_i32_0 = arith.constant 0 : i32
    %c0_i32_1 = arith.constant 0 : i32
    return %c0_i32, %c0_i32_0 : i32, i32
  }
  func.func @transform_2(%arg0: i32) -> (i32, i32) {
    %c0_i32 = arith.constant 0 : i32
    %c0_i32_0 = arith.constant 0 : i32
    %c0_i32_1 = arith.constant 0 : i32
    return %c0_i32, %c0_i32_0 : i32, i32
  }
  func.func @transform_3(%arg0: i32) -> (i32, i32, i32) {
    %c0_i32 = arith.constant 0 : i32
    %c0_i32_0 = arith.constant 0 : i32
    %c0_i32_1 = arith.constant 0 : i32
    %c0_i32_2 = arith.constant 0 : i32
    return %c0_i32, %c0_i32_0, %c0_i32_1 : i32, i32, i32
  }
  func.func @transform_4(%arg0: i32) -> (i32, i32) {
    %c0_i32 = arith.constant 0 : i32
    %c0_i32_0 = arith.constant 0 : i32
    %c0_i32_1 = arith.constant 0 : i32
    return %c0_i32, %c0_i32_0 : i32, i32
  }
  func.func @transform_5(%arg0: i32) -> (i32, i32, i32) {
    %c0_i32 = arith.constant 0 : i32
    %c0_i32_0 = arith.constant 0 : i32
    %c0_i32_1 = arith.constant 0 : i32
    return %arg0, %c0_i32, %c0_i32_0 : i32, i32, i32
  }
  func.func @transform_6(%arg0: i32) -> (i32, i32, i32) {
    %c0_i32 = arith.constant 0 : i32
    %c0_i32_0 = arith.constant 0 : i32
    %c0_i32_1 = arith.constant 0 : i32
    return %arg0, %c0_i32, %c0_i32_0 : i32, i32, i32
  }
}

</mosaic_0001>

<llo_original>
// kernel: tpu_custom_call.1
$region0: #{tpu_custom_call.1}
  #allocation0 [shape = 'u32[]', space=smem, size = 0x4, offset = 0x4, fixed_abs, tag = 'smem constant byte address 0x4 - core index']
  #allocation1 [shape = 'u32[72,128]{1,0:T(1,128)}', space=vmem, size = 0x9000, scoped, tag = 'internal scratch']
  #allocation2 [shape = 'f32[96,128]{1,0:T(8,128)}', space=vmem, size = 0xc000, scoped, tag = 'scratch operand']
  %s0 = inlined_call_operand.hbm [shape: f32[2,64,64], index: 0, kind: input, shape index: {}]
  %s1 = inlined_call_operand.hbm [shape: f32[64,128], index: 1, kind: input, shape index: {}]
  %s2 = inlined_call_operand.vmem [shape: f32[1,128], index: 2, kind: input, shape index: {}]
  %s3 = inlined_call_operand.hbm [shape: f32[9,128,128], index: 3, kind: input, shape index: {}]
  %s4 = inlined_call_operand.vmem [shape: f32[1,128], index: 4, kind: input, shape index: {}]
  %s5 = inlined_call_operand.vmem [shape: f32[2,128,64], index: 5, kind: output, shape index: {0}]
  %s6 = inlined_call_operand.hbm [shape: f32[2,64,128], index: 6, kind: output, shape index: {1}]
  %7 = xla_tuple %s5, %s6
  %s8 = sld [smem:[#allocation0]]
  $region73: #{tpu_custom_call.1} parent=0
    _
  %s10 = ssub.s32 1, %s8
  %s11 = scalar_select 0, %s10, %s8
  $region1: #{tpu_custom_call.1} parent=0
    #allocation3 [shape = 'u8[65536]{0}', space=vmem, size = 0x10000, scoped, tag = 'input window, operand 0']
    #allocation4 [shape = 's32[2]{0}', space=sflag, size = 0x8, scoped, tag = 'scoped memory for tpu_custom_call.1']
    #allocation5 [shape = 's32[2]{0}', space=sflag, size = 0x8, scoped, tag = 'scoped memory for tpu_custom_call.1']
    #allocation6 [shape = 'u8[32768]{0}', space=vmem, size = 0x8000, scoped, tag = 'input window, operand 1, single buffered']
    #allocation7 [shape = 's32[1]{0}', space=sflag, size = 0x4, scoped, tag = 'scoped memory for tpu_custom_call.1']
    #allocation8 [shape = 'u8[589824]{0}', space=vmem, size = 0x90000, scoped, tag = 'input window, operand 3, single buffered']
    #allocation9 [shape = 'u8[65536]{0}', space=vmem, size = 0x10000, scoped, tag = 'output window, operand 1']
    %12 = vsyncpa [#allocation4], 0
    %s13 = scalar_lea.sflag [#allocation4], 1
    %14 = vsyncpa %s13, 0
    %15 = vsyncpa [#allocation7], 0
    %16 = vsyncpa [#allocation5], 0
    %s17 = scalar_lea.sflag [#allocation5], 1
    %18 = vsyncpa %s17, 0
    loop: start=0, step=1, limit=4
    $region2: #{tpu_custom_call.1} parent=1 // loop_pre_header
      _
    $region3: #{tpu_custom_call.1} parent=1 // loop_header
      %s20 = sphi 0, %s24
      %p21 = scmp.ge.s32.totalorder %s20, 4
      %s30 = sphi 0, %s32
      %s33 = sphi 0, %s30
      %s34 = sphi 0, %s33
      %s50 = sphi 0, %s34
      %s54 = sphi 0, %s54
      %s56 = sphi 0, %s54
      %s57 = sphi 0, %s56
      %s71 = sphi 0, %s57
      %s75 = sphi 0, %s75
      %s77 = sphi 0, %s75
      %s78 = sphi 0, %s77
      %s92 = sphi 0, %s78
      %s96 = sphi 0, %s96
      %s98 = sphi 0, %s96
      %s99 = sphi 0, %s98
      %s113 = sphi 0, %s99
      %s117 = sphi 0, %s117
      %s119 = sphi 0, %s117
      %s120 = sphi 0, %s119
      %s134 = sphi 0, %s120
      %s140 = sphi 0, %s142
      %s143 = sphi 0, %s140
      %s144 = sphi 0, %s143
      %s160 = sphi 0, %s144
      %s166 = sphi 0, %s168
      %s169 = sphi 0, %s166
      %s170 = sphi 0, %s169
      %s186 = sphi 0, %s170
    $region4: #{tpu_custom_call.1} parent=1 // loop_header_branch
      %23 = sbr.rel (%p21) target = $region8
    $region5: #{tpu_custom_call.1} parent=1 // loop_body
      %s25 = ssub.s32 %s20, 1
      %s26 = ssub.s32 %s20, 2
      %s27 = sadd.s32 %s20, 1
      %s28 = ssub.s32 %s20, %s27
      %p29 = scmp.eq.s32.totalorder %s28, 0
      %s31 = sadd.s32 %s30, 1
      %s32 = scalar_select %p29, %s30, %s31
      %p35 = pneg %p29
      %p36 = scmp.eq.s32.totalorder %s20, 1
      %p37 = por %p35, %p36
      %p38 = scmp.ne.s32.totalorder %s30, %s33
      %p39 = scmp.eq.s32.totalorder %s20, 0
      %p40 = por %p38, %p39
      %p41 = scmp.ne.s32.totalorder %s30, %s33
      %p42 = scmp.eq.s32.totalorder %s25, 1
      %p43 = por %p41, %p42
      %p44 = scmp.ne.s32.totalorder %s33, %s34
      %p45 = scmp.eq.s32.totalorder %s25, 0
      %p46 = por %p44, %p45
      %p47 = scmp.ne.s32.totalorder %s33, %s34
      %p48 = scmp.eq.s32.totalorder %s26, 1
      %p49 = por %p47, %p48
      %p51 = scmp.ne.s32.totalorder %s34, %s50
      %p52 = scmp.eq.s32.totalorder %s26, 0
      %p53 = por %p51, %p52
      %s55 = sadd.s32 %s54, 1
      %p58 = scmp.eq.s32.totalorder %s20, 1
      %p59 = scmp.ne.s32.totalorder %s54, %s56
      %p60 = scmp.eq.s32.totalorder %s20, 0
      %p61 = por %p59, %p60
      %p62 = scmp.ne.s32.totalorder %s54, %s56
      %p63 = scmp.eq.s32.totalorder %s25, 1
      %p64 = por %p62, %p63
      %p65 = scmp.ne.s32.totalorder %s56, %s57
      %p66 = scmp.eq.s32.totalorder %s25, 0
      %p67 = por %p65, %p66
      %p68 = scmp.ne.s32.totalorder %s56, %s57
      %p69 = scmp.eq.s32.totalorder %s26, 1
      %p70 = por %p68, %p69
      %p72 = scmp.ne.s32.totalorder %s57, %s71
      %p73 = scmp.eq.s32.totalorder %s26, 0
      %p74 = por %p72, %p73
      %s76 = sadd.s32 %s75, 1
      %p79 = scmp.eq.s32.totalorder %s20, 1
      %p80 = scmp.ne.s32.totalorder %s75, %s77
      %p81 = scmp.eq.s32.totalorder %s20, 0
      %p82 = por %p80, %p81
      %p83 = scmp.ne.s32.totalorder %s75, %s77
      %p84 = scmp.eq.s32.totalorder %s25, 1
      %p85 = por %p83, %p84
      %p86 = scmp.ne.s32.totalorder %s77, %s78
      %p87 = scmp.eq.s32.totalorder %s25, 0
      %p88 = por %p86, %p87
      %p89 = scmp.ne.s32.totalorder %s77, %s78
      %p90 = scmp.eq.s32.totalorder %s26, 1
      %p91 = por %p89, %p90
      %p93 = scmp.ne.s32.totalorder %s78, %s92
      %p94 = scmp.eq.s32.totalorder %s26, 0
      %p95 = por %p93, %p94
      %s97 = sadd.s32 %s96, 1
      %p100 = scmp.eq.s32.totalorder %s20, 1
      %p101 = scmp.ne.s32.totalorder %s96, %s98
      %p102 = scmp.eq.s32.totalorder %s20, 0
      %p103 = por %p101, %p102
      %p104 = scmp.ne.s32.totalorder %s96, %s98
      %p105 = scmp.eq.s32.totalorder %s25, 1
      %p106 = por %p104, %p105
      %p107 = scmp.ne.s32.totalorder %s98, %s99
      %p108 = scmp.eq.s32.totalorder %s25, 0
      %p109 = por %p107, %p108
      %p110 = scmp.ne.s32.totalorder %s98, %s99
      %p111 = scmp.eq.s32.totalorder %s26, 1
      %p112 = por %p110, %p111
      %p114 = scmp.ne.s32.totalorder %s99, %s113
      %p115 = scmp.eq.s32.totalorder %s26, 0
      %p116 = por %p114, %p115
      %s118 = sadd.s32 %s117, 1
      %p121 = scmp.eq.s32.totalorder %s20, 1
      %p122 = scmp.ne.s32.totalorder %s117, %s119
      %p123 = scmp.eq.s32.totalorder %s20, 0
      %p124 = por %p122, %p123
      %p125 = scmp.ne.s32.totalorder %s117, %s119
      %p126 = scmp.eq.s32.totalorder %s25, 1
      %p127 = por %p125, %p126
      %p128 = scmp.ne.s32.totalorder %s119, %s120
      %p129 = scmp.eq.s32.totalorder %s25, 0
      %p130 = por %p128, %p129
      %p131 = scmp.ne.s32.totalorder %s119, %s120
      %p132 = scmp.eq.s32.totalorder %s26, 1
      %p133 = por %p131, %p132
      %p135 = scmp.ne.s32.totalorder %s120, %s134
      %p136 = scmp.eq.s32.totalorder %s26, 0
      %p137 = por %p135, %p136
      %s138 = ssub.s32 %s20, %s27
      %p139 = scmp.eq.s32.totalorder %s138, 0
      %s141 = sadd.s32 %s140, 1
      %s142 = scalar_select %p139, %s140, %s141
      %p145 = pneg %p139
      %p146 = scmp.eq.s32.totalorder %s20, 1
      %p147 = por %p145, %p146
      %p148 = scmp.ne.s32.totalorder %s140, %s143
      %p149 = scmp.eq.s32.totalorder %s20, 0
      %p150 = por %p148, %p149
      %p151 = scmp.ne.s32.totalorder %s140, %s143
      %p152 = scmp.eq.s32.totalorder %s25, 1
      %p153 = por %p151, %p152
      %p154 = scmp.ne.s32.totalorder %s143, %s144
      %p155 = scmp.eq.s32.totalorder %s25, 0
      %p156 = por %p154, %p155
      %p157 = scmp.ne.s32.totalorder %s143, %s144
      %p158 = scmp.eq.s32.totalorder %s26, 1
      %p159 = por %p157, %p158
      %p161 = scmp.ne.s32.totalorder %s144, %s160
      %p162 = scmp.eq.s32.totalorder %s26, 0
      %p163 = por %p161, %p162
      %s164 = ssub.s32 %s20, %s27
      %p165 = scmp.eq.s32.totalorder %s164, 0
      %s167 = sadd.s32 %s166, 1
      %s168 = scalar_select %p165, %s166, %s167
      %p171 = pneg %p165
      %p172 = scmp.eq.s32.totalorder %s20, 1
      %p173 = por %p171, %p172
      %p174 = scmp.ne.s32.totalorder %s166, %s169
      %p175 = scmp.eq.s32.totalorder %s20, 0
      %p176 = por %p174, %p175
      %p177 = scmp.ne.s32.totalorder %s166, %s169
      %p178 = scmp.eq.s32.totalorder %s25, 1
      %p179 = por %p177, %p178
      %p180 = scmp.ne.s32.totalorder %s169, %s170
      %p181 = scmp.eq.s32.totalorder %s25, 0
      %p182 = por %p180, %p181
      %p183 = scmp.ne.s32.totalorder %s169, %s170
      %p184 = scmp.eq.s32.totalorder %s26, 1
      %p185 = por %p183, %p184
      %p187 = scmp.ne.s32.totalorder %s170, %s186
      %p188 = scmp.eq.s32.totalorder %s26, 0
      %p189 = por %p187, %p188
      %p190 = scmp.le.s32.totalorder 1, %s20
      %p191 = scmp.lt.s32.totalorder %s20, 3
      %p192 = pnand %p190, %p191
      %p193 = pneg %p192
      // Predicated region
      $region9: #{tpu_custom_call.1} parent=5 // pred_check
        _
      $region10: #{tpu_custom_call.1} parent=5 // pred_check_branch
        %195 = sbr.rel (%p192) target = $region12
      $region11: #{tpu_custom_call.1} parent=5 // pred_region
        %s196 = ssub.s32 %s20, 1
        // Predicated region
        $region13: #{tpu_custom_call.1} parent=11 // pred_check
          %p197 = pneg %p67
        $region14: #{tpu_custom_call.1} parent=11 // pred_check_branch
          %199 = sbr.rel (%p197) target = $region16
        $region15: #{tpu_custom_call.1} parent=11 // pred_region
          %201 = vsyncadd [#allocation7], 0
          %s202 = sshll.u32 %s1, 4
          %s203 = int_to_ptr.hbm [resolvable:$true] %s202
          %s204 = sshll.u32 [#allocation6], 4
          %s205 = int_to_ptr.vmem [resolvable:$true] %s204
          %210 = dma.hbm_to_vmem [thread:$0]  %s203, 1024, %s205, [#allocation7], 128, 128, 8
        $region16: #{tpu_custom_call.1} parent=11 // pred_fallthru
          _
        // Predicated region
        $region17: #{tpu_custom_call.1} parent=11 // pred_check
          %p211 = pneg %p88
        $region18: #{tpu_custom_call.1} parent=11 // pred_check_branch
          %213 = sbr.rel (%p211) target = $region20
        $region19: #{tpu_custom_call.1} parent=11 // pred_region
          _
        $region20: #{tpu_custom_call.1} parent=11 // pred_fallthru
          _
        // Predicated region
        $region21: #{tpu_custom_call.1} parent=11 // pred_check
          %p214 = pneg %p109
        $region22: #{tpu_custom_call.1} parent=11 // pred_check_branch
          %216 = sbr.rel (%p214) target = $region24
        $region23: #{tpu_custom_call.1} parent=11 // pred_region
          %218 = vsyncadd [#allocation7], 0
          %s219 = sshll.u32 %s3, 4
          %s220 = int_to_ptr.hbm [resolvable:$true] %s219
          %s221 = sshll.u32 [#allocation8], 4
          %s222 = int_to_ptr.vmem [resolvable:$true] %s221
          %227 = dma.hbm_to_vmem [thread:$0]  %s220, 18432, %s222, [#allocation7], 128, 128, 8
        $region24: #{tpu_custom_call.1} parent=11 // pred_fallthru
          _
        // Predicated region
        $region25: #{tpu_custom_call.1} parent=11 // pred_check
          %p228 = pneg %p130
        $region26: #{tpu_custom_call.1} parent=11 // pred_check_branch
          %230 = sbr.rel (%p228) target = $region28
        $region27: #{tpu_custom_call.1} parent=11 // pred_region
          _
        $region28: #{tpu_custom_call.1} parent=11 // pred_fallthru
          _
      $region12: #{tpu_custom_call.1} parent=5 // pred_fallthru
        _
      %p231 = scmp.lt.s32.totalorder %s20, 2
      // Predicated region
      $region29: #{tpu_custom_call.1} parent=5 // pred_check
        %p232 = pneg %p231
      $region30: #{tpu_custom_call.1} parent=5 // pred_check_branch
        %234 = sbr.rel (%p232) target = $region32
      $region31: #{tpu_custom_call.1} parent=5 // pred_region
        // Predicated region
        $region33: #{tpu_custom_call.1} parent=31 // pred_check
          %p235 = pneg %p40
        $region34: #{tpu_custom_call.1} parent=31 // pred_check_branch
          %237 = sbr.rel (%p235) target = $region36
        $region35: #{tpu_custom_call.1} parent=31 // pred_region
          %s238 = sand.u32 %s30, 1
          %s239 = scalar_lea.sflag [#allocation4], %s238
          %s240 = sand.u32 %s30, 1
          %s241 = smul.addr %s240, 64
          %s242 = scalar_lea.vmem [#allocation3], %s241
          %244 = vsyncadd %s239, 0
          %s245 = smul.addr %s20, 8
          %s246 = smul.addr %s245, 8
          %s247 = scalar_lea.hbm %s0, %s246
          %s248 = sshll.u32 %s247, 4
          %s249 = int_to_ptr.hbm [resolvable:$true] %s248
          %s250 = sshll.u32 %s242, 4
          %s251 = int_to_ptr.vmem [resolvable:$true] %s250
          %256 = dma.hbm_to_vmem [thread:$0]  %s249, 1024, %s251, %s239, 128, 128, 8
        $region36: #{tpu_custom_call.1} parent=31 // pred_fallthru
          _
      $region32: #{tpu_custom_call.1} parent=5 // pred_fallthru
        _
      %p257 = scmp.le.s32.totalorder 1, %s20
      %p258 = scmp.lt.s32.totalorder %s20, 3
      %p259 = pnand %p257, %p258
      %p260 = pneg %p259
      // Predicated region
      $region37: #{tpu_custom_call.1} parent=5 // pred_check
        _
      $region38: #{tpu_custom_call.1} parent=5 // pred_check_branch
        %262 = sbr.rel (%p259) target = $region40
      $region39: #{tpu_custom_call.1} parent=5 // pred_region
        %s263 = ssub.s32 %s20, 1
        %s264 = sand.u32 %s33, 1
        %s265 = scalar_lea.sflag [#allocation4], %s264
        %s266 = sand.u32 %s33, 1
        %s267 = smul.addr %s266, 64
        %s268 = scalar_lea.vmem [#allocation3], %s267
        // Predicated region
        $region41: #{tpu_custom_call.1} parent=39 // pred_check
          %p269 = pneg %p46
        $region42: #{tpu_custom_call.1} parent=39 // pred_check_branch
          %271 = sbr.rel (%p269) target = $region44
        $region43: #{tpu_custom_call.1} parent=39 // pred_region
          %273 = dma.done %s265, 1024
        $region44: #{tpu_custom_call.1} parent=39 // pred_fallthru
          _
        // Predicated region
        $region45: #{tpu_custom_call.1} parent=39 // pred_check
          %p274 = pneg %p67
        $region46: #{tpu_custom_call.1} parent=39 // pred_check_branch
          %276 = sbr.rel (%p274) target = $region48
        $region47: #{tpu_custom_call.1} parent=39 // pred_region
          %278 = dma.done [#allocation7], 1024
        $region48: #{tpu_custom_call.1} parent=39 // pred_fallthru
          _
        // Predicated region
        $region49: #{tpu_custom_call.1} parent=39 // pred_check
          %p279 = pneg %p109
        $region50: #{tpu_custom_call.1} parent=39 // pred_check_branch
          %281 = sbr.rel (%p279) target = $region52
        $region51: #{tpu_custom_call.1} parent=39 // pred_region
          %283 = dma.done [#allocation7], 18432
        $region52: #{tpu_custom_call.1} parent=39 // pred_fallthru
          _
        %s284 = sand.u32 %s33, 1
        %s285 = scalar_lea.sflag [#allocation4], %s284
        %s286 = sand.u32 %s33, 1
        %s287 = smul.addr %s286, 64
        %s288 = scalar_lea.vmem [#allocation3], %s287
        %p289 = pneg %p46
        %p290 = pneg %p43
        %p291 = pneg %p67
        %p292 = pneg %p64
        %p293 = pneg %p88
        %p294 = pneg %p85
        %p295 = pneg %p109
        %p296 = pneg %p106
        %p297 = pneg %p130
        %p298 = pneg %p127
        %p299 = pneg %p156
        %p300 = pneg %p153
        %p301 = scmp.lt.s32.totalorder %s25, 1
        %s302 = scalar_select %p301, %s25, 1
        %s303 = smul.addr %s302, 16
        %s304 = smul.addr %s303, 8
        %s305 = scalar_lea.vmem %s5, %s304
        %p306 = pneg %p182
        %p307 = pneg %p179
        %s308 = sand.u32 %s169, 1
        %s309 = scalar_lea.sflag [#allocation5], %s308
        %s310 = sand.u32 %s169, 1
        %s311 = smul.addr %s310, 64
        %s312 = scalar_lea.vmem [#allocation9], %s311
        %p313 = scmp.lt.s32.totalorder %s25, 1
        %s314 = scalar_select %p313, %s25, 1
        %s315 = smul.addr %s314, 16
        %s316 = smul.addr %s315, 8
        %s317 = scalar_lea.vmem %s5, %s316
        %v318 = vld [vmem:[%s268] sm:$0xff]
        %v319 = vld [vmem:[%s268 + $0x8] sm:$0xff]
        %v320 = vld [vmem:[%s268 + $0x10] sm:$0xff]
        %v321 = vld [vmem:[%s268 + $0x18] sm:$0xff]
        %v322 = vld [vmem:[%s268 + $0x20] sm:$0xff]
        %v323 = vld [vmem:[%s268 + $0x28] sm:$0xff]
        %v324 = vld [vmem:[%s268 + $0x30] sm:$0xff]
        %v325 = vld [vmem:[%s268 + $0x38] sm:$0xff]
        %v326 = vld [vmem:[#allocation6] sm:$0xff]
        %v327 = vld [vmem:[#allocation6 + $0x8] sm:$0xff]
        %v328 = vld [vmem:[#allocation6 + $0x10] sm:$0xff]
        %v329 = vld [vmem:[#allocation6 + $0x18] sm:$0xff]
        %v330 = vld [vmem:[#allocation6 + $0x20] sm:$0xff]
        %v331 = vld [vmem:[#allocation6 + $0x28] sm:$0xff]
        %v332 = vld [vmem:[#allocation6 + $0x30] sm:$0xff]
        %v333 = vld [vmem:[#allocation6 + $0x38] sm:$0xff]
        %v334 = vld [vmem:[%s2] sm:$0x1]
        %v336 = vperm.slane %v334, 0
        %vm338 = vcmask 523264
        %v340 = vsel %vm338, %v318, 0
        %v343 = vsel %vm338, %v319, 0
        %v346 = vsel %vm338, %v320, 0
        %v349 = vsel %vm338, %v321, 0
        %v352 = vsel %vm338, %v322, 0
        %v355 = vsel %vm338, %v323, 0
        %v358 = vsel %vm338, %v324, 0
        %v361 = vsel %vm338, %v325, 0
        %363 = vmatpush.msra.mxu0 0.0
        %364 = vmatpush.msra.mxu0 0.0
        %365 = vmatpush.msra.mxu0 0.0
        %366 = vmatpush.msra.mxu0 0.0
        %367 = vmatpush.msra.mxu0 0.0
        %368 = vmatpush.msra.mxu0 0.0
        %369 = vmatpush.msra.mxu0 0.0
        %370 = vmatpush.msra.mxu0 0.0
        %371 = vmatpush.msra.mxu0 %v333
        %372 = vmatpush.msra.mxu0 %v332
        %373 = vmatpush.msra.mxu0 %v331
        %374 = vmatpush.msra.mxu0 %v330
        %375 = vmatpush.msra.mxu0 %v329
        %376 = vmatpush.msra.mxu0 %v328
        %377 = vmatpush.msra.mxu0 %v327
        %378 = vmatpush.msra.mxu0 %v326
        %379 = vmatmul.f32.gmra.mxu0 %v340
        %v380 = vpop.f32.mrf.mxu0
        %v381 = vadd.f32 %v336, %v380
        %382 = vmatmul.f32.gmra.mxu0 %v343
        %v383 = vpop.f32.mrf.mxu0
        %v384 = vadd.f32 %v336, %v383
        %385 = vmatmul.f32.gmra.mxu0 %v346
        %v386 = vpop.f32.mrf.mxu0
        %v387 = vadd.f32 %v336, %v386
        %388 = vmatmul.f32.gmra.mxu0 %v349
        %v389 = vpop.f32.mrf.mxu0
        %v390 = vadd.f32 %v336, %v389
        %391 = vmatmul.f32.gmra.mxu0 %v352
        %v392 = vpop.f32.mrf.mxu0
        %v393 = vadd.f32 %v336, %v392
        %394 = vmatmul.f32.gmra.mxu0 %v355
        %v395 = vpop.f32.mrf.mxu0
        %v396 = vadd.f32 %v336, %v395
        %397 = vmatmul.f32.gmra.mxu0 %v358
        %v398 = vpop.f32.mrf.mxu0
        %v399 = vadd.f32 %v336, %v398
        %400 = vmatmul.f32.gmra.mxu0 %v361
        %v401 = vpop.f32.mrf.mxu0
        %v402 = vadd.f32 %v336, %v401
        %403 = vdwg.mxu0
        %404 = vst [vmem:[#allocation2] sm:$0xff] 0.0
        %405 = vst [vmem:[#allocation2 + $0x8] sm:$0xff] 0.0
        %406 = vst [vmem:[#allocation2 + $0x50] sm:$0xff] 0.0
        %407 = vst [vmem:[#allocation2 + $0x58] sm:$0xff] 0.0
        %408 = vst [vmem:[#allocation2 + $0x10] sm:$0xff] %v381
        %409 = vst [vmem:[#allocation2 + $0x18] sm:$0xff] %v384
        %410 = vst [vmem:[#allocation2 + $0x20] sm:$0xff] %v387
        %411 = vst [vmem:[#allocation2 + $0x28] sm:$0xff] %v390
        %412 = vst [vmem:[#allocation2 + $0x30] sm:$0xff] %v393
        %413 = vst [vmem:[#allocation2 + $0x38] sm:$0xff] %v396
        %414 = vst [vmem:[#allocation2 + $0x40] sm:$0xff] %v399
        %415 = vst [vmem:[#allocation2 + $0x48] sm:$0xff] %v402
        %v416 = vld [vmem:[#allocation2 + $0x10] sm:$0xff]
        %v417 = vld [vmem:[#allocation2 + $0x18] sm:$0xff]
        %v418 = vld [vmem:[#allocation2 + $0x20] sm:$0xff]
        %v419 = vld [vmem:[#allocation2 + $0x28] sm:$0xff]
        %v420 = vld [vmem:[#allocation2 + $0x30] sm:$0xff]
        %v421 = vld [vmem:[#allocation2 + $0x38] sm:$0xff]
        %v422 = vld [vmem:[#allocation2 + $0x40] sm:$0xff]
        %v423 = vld [vmem:[#allocation2 + $0x48] sm:$0xff]
        %424 = vst [vmem:[%s312] sm:$0xff] %v416
        %425 = vst [vmem:[%s312 + $0x8] sm:$0xff] %v417
        %426 = vst [vmem:[%s312 + $0x10] sm:$0xff] %v418
        %427 = vst [vmem:[%s312 + $0x18] sm:$0xff] %v419
        %428 = vst [vmem:[%s312 + $0x20] sm:$0xff] %v420
        %429 = vst [vmem:[%s312 + $0x28] sm:$0xff] %v421
        %430 = vst [vmem:[%s312 + $0x30] sm:$0xff] %v422
        %431 = vst [vmem:[%s312 + $0x38] sm:$0xff] %v423
        %v432 = vlaneseq
        %v433 = vshrl.u32 %v432, 7
        %v434 = vadd.s32 %v433, 8
        %v435 = vadd.s32 %v433, 16
        %v436 = vadd.s32 %v433, 24
        %v437 = vadd.s32 %v433, 32
        %v438 = vadd.s32 %v433, 40
        %v439 = vadd.s32 %v433, 48
        %v440 = vadd.s32 %v433, 56
        %vm441 = vcmp.lt.s32.totalorder %v433, 0
        %v442 = vsub.s32 0, %v433
        %v443 = vsel %vm441, %v442, %v433
        %v444 = vshrl.u32 %v443, 3
        %v445 = vand.u32 %v443, 7
        %v446 = vsub.s32 0, %v445
        %v447 = vsel %vm441, %v446, %v445
        %vm448 = vcmp.lt.s32.totalorder %v434, 0
        %v449 = vsub.s32 0, %v434
        %v450 = vsel %vm448, %v449, %v434
        %v451 = vshrl.u32 %v450, 3
        %v452 = vand.u32 %v450, 7
        %v453 = vsub.s32 0, %v452
        %v454 = vsel %vm448, %v453, %v452
        %vm455 = vcmp.lt.s32.totalorder %v435, 0
        %v456 = vsub.s32 0, %v435
        %v457 = vsel %vm455, %v456, %v435
        %v458 = vshrl.u32 %v457, 3
        %v459 = vand.u32 %v457, 7
        %v460 = vsub.s32 0, %v459
        %v461 = vsel %vm455, %v460, %v459
        %vm462 = vcmp.lt.s32.totalorder %v436, 0
        %v463 = vsub.s32 0, %v436
        %v464 = vsel %vm462, %v463, %v436
        %v465 = vshrl.u32 %v464, 3
        %v466 = vand.u32 %v464, 7
        %v467 = vsub.s32 0, %v466
        %v468 = vsel %vm462, %v467, %v466
        %vm469 = vcmp.lt.s32.totalorder %v437, 0
        %v470 = vsub.s32 0, %v437
        %v471 = vsel %vm469, %v470, %v437
        %v472 = vshrl.u32 %v471, 3
        %v473 = vand.u32 %v471, 7
        %v474 = vsub.s32 0, %v473
        %v475 = vsel %vm469, %v474, %v473
        %vm476 = vcmp.lt.s32.totalorder %v438, 0
        %v477 = vsub.s32 0, %v438
        %v478 = vsel %vm476, %v477, %v438
        %v479 = vshrl.u32 %v478, 3
        %v480 = vand.u32 %v478, 7
        %v481 = vsub.s32 0, %v480
        %v482 = vsel %vm476, %v481, %v480
        %vm483 = vcmp.lt.s32.totalorder %v439, 0
        %v484 = vsub.s32 0, %v439
        %v485 = vsel %vm483, %v484, %v439
        %v486 = vshrl.u32 %v485, 3
        %v487 = vand.u32 %v485, 7
        %v488 = vsub.s32 0, %v487
        %v489 = vsel %vm483, %v488, %v487
        %vm490 = vcmp.lt.s32.totalorder %v440, 0
        %v491 = vsub.s32 0, %v440
        %v492 = vsel %vm490, %v491, %v440
        %v493 = vshrl.u32 %v492, 3
        %v494 = vand.u32 %v492, 7
        %v495 = vsub.s32 0, %v494
        %v496 = vsel %vm490, %v495, %v494
        %vm497 = vcmp.ne.s32.totalorder %v447, 0
        %vm498 = vcmp.ne.s32.totalorder %v454, 0
        %vm499 = vcmp.ne.s32.totalorder %v461, 0
        %vm500 = vcmp.ne.s32.totalorder %v468, 0
        %vm501 = vcmp.ne.s32.totalorder %v475, 0
        %vm502 = vcmp.ne.s32.totalorder %v482, 0
        %vm503 = vcmp.ne.s32.totalorder %v489, 0
        %vm504 = vcmp.ne.s32.totalorder %v496, 0
        %vm505 = vcmp.lt.s32.totalorder %v447, 0
        %vm506 = vcmp.lt.s32.totalorder %v454, 0
        %vm507 = vcmp.lt.s32.totalorder %v461, 0
        %vm508 = vcmp.lt.s32.totalorder %v468, 0
        %vm509 = vcmp.lt.s32.totalorder %v475, 0
        %vm510 = vcmp.lt.s32.totalorder %v482, 0
        %vm511 = vcmp.lt.s32.totalorder %v489, 0
        %vm512 = vcmp.lt.s32.totalorder %v496, 0
        %vm513 = vmand %vm505, %vm497
        %vm514 = vmand %vm506, %vm498
        %vm515 = vmand %vm507, %vm499
        %vm516 = vmand %vm508, %vm500
        %vm517 = vmand %vm509, %vm501
        %vm518 = vmand %vm510, %vm502
        %vm519 = vmand %vm511, %vm503
        %vm520 = vmand %vm512, %vm504
        %v521 = vadd.s32 %v447, 8
        %v522 = vadd.s32 %v454, 8
        %v523 = vadd.s32 %v461, 8
        %v524 = vadd.s32 %v468, 8
        %v525 = vadd.s32 %v475, 8
        %v526 = vadd.s32 %v482, 8
        %v527 = vadd.s32 %v489, 8
        %v528 = vadd.s32 %v496, 8
        %v529 = vsel %vm513, %v521, %v447
        %v530 = vsel %vm514, %v522, %v454
        %v531 = vsel %vm515, %v523, %v461
        %v532 = vsel %vm516, %v524, %v468
        %v533 = vsel %vm517, %v525, %v475
        %v534 = vsel %vm518, %v526, %v482
        %v535 = vsel %vm519, %v527, %v489
        %v536 = vsel %vm520, %v528, %v496
        %v537 = vld [vmem:[#allocation2 + $0x7] sm:$0xff]
        %v538 = vld [vmem:[#allocation2 + $0xf] sm:$0xff]
        %v539 = vld [vmem:[#allocation2 + $0x17] sm:$0xff]
        %v540 = vld [vmem:[#allocation2 + $0x1f] sm:$0xff]
        %v541 = vld [vmem:[#allocation2 + $0x27] sm:$0xff]
        %v542 = vld [vmem:[#allocation2 + $0x2f] sm:$0xff]
        %v543 = vld [vmem:[#allocation2 + $0x37] sm:$0xff]
        %v544 = vld [vmem:[#allocation2 + $0x3f] sm:$0xff]
        %vm545 = vcmp.gt.s32.totalorder %v529, 0
        %vm546 = vcmp.gt.s32.totalorder %v530, 0
        %vm547 = vcmp.gt.s32.totalorder %v531, 0
        %vm548 = vcmp.gt.s32.totalorder %v532, 0
        %vm549 = vcmp.gt.s32.totalorder %v533, 0
        %vm550 = vcmp.gt.s32.totalorder %v534, 0
        %vm551 = vcmp.gt.s32.totalorder %v535, 0
        %vm552 = vcmp.gt.s32.totalorder %v536, 0
        %v553 = vsel %vm545, 1, 0
        %v554 = vsel %vm546, 1, 0
        %v555 = vsel %vm547, 1, 0
        %v556 = vsel %vm548, 1, 0
        %v557 = vsel %vm549, 1, 0
        %v558 = vsel %vm550, 1, 0
        %v559 = vsel %vm551, 1, 0
        %v560 = vsel %vm552, 1, 0
        %vm561 = vcmp.eq.s32.totalorder %v553, 1
        %vm562 = vcmp.eq.s32.totalorder %v554, 1
        %vm563 = vcmp.eq.s32.totalorder %v555, 1
        %vm564 = vcmp.eq.s32.totalorder %v556, 1
        %vm565 = vcmp.eq.s32.totalorder %v557, 1
        %vm566 = vcmp.eq.s32.totalorder %v558, 1
        %vm567 = vcmp.eq.s32.totalorder %v559, 1
        %vm568 = vcmp.eq.s32.totalorder %v560, 1
        %v569 = vsel %vm561, %v537, 0.0
        %v570 = vsel %vm562, %v538, 0.0
        %v571 = vsel %vm563, %v539, 0.0
        %v572 = vsel %vm564, %v540, 0.0
        %v573 = vsel %vm565, %v541, 0.0
        %v574 = vsel %vm566, %v542, 0.0
        %v575 = vsel %vm567, %v543, 0.0
        %v576 = vsel %vm568, %v544, 0.0
        %v577 = vld [vmem:[#allocation8] sm:$0xff]
        %v578 = vld [vmem:[#allocation8 + $0x8] sm:$0xff]
        %v579 = vld [vmem:[#allocation8 + $0x10] sm:$0xff]
        %v580 = vld [vmem:[#allocation8 + $0x18] sm:$0xff]
        %v581 = vld [vmem:[#allocation8 + $0x20] sm:$0xff]
        %v582 = vld [vmem:[#allocation8 + $0x28] sm:$0xff]
        %v583 = vld [vmem:[#allocation8 + $0x30] sm:$0xff]
        %v584 = vld [vmem:[#allocation8 + $0x38] sm:$0xff]
        %v585 = vld [vmem:[#allocation8 + $0x40] sm:$0xff]
        %v586 = vld [vmem:[#allocation8 + $0x48] sm:$0xff]
        %v587 = vld [vmem:[#allocation8 + $0x50] sm:$0xff]
        %v588 = vld [vmem:[#allocation8 + $0x58] sm:$0xff]
        %v589 = vld [vmem:[#allocation8 + $0x60] sm:$0xff]
        %v590 = vld [vmem:[#allocation8 + $0x68] sm:$0xff]
        %v591 = vld [vmem:[#allocation8 + $0x70] sm:$0xff]
        %v592 = vld [vmem:[#allocation8 + $0x78] sm:$0xff]
        %v593 = vld [vmem:[#allocation2 + $0x8] sm:$0xff]
        %v594 = vld [vmem:[#allocation2 + $0x10] sm:$0xff]
        %v595 = vld [vmem:[#allocation2 + $0x18] sm:$0xff]
        %v596 = vld [vmem:[#allocation2 + $0x20] sm:$0xff]
        %v597 = vld [vmem:[#allocation2 + $0x28] sm:$0xff]
        %v598 = vld [vmem:[#allocation2 + $0x30] sm:$0xff]
        %v599 = vld [vmem:[#allocation2 + $0x38] sm:$0xff]
        %v600 = vld [vmem:[#allocation2 + $0x40] sm:$0xff]
        %s601 = scalar_lea.vmem [#allocation8], 128
        %v602 = vld [vmem:[%s601] sm:$0xff]
        %v603 = vld [vmem:[%s601 + $0x8] sm:$0xff]
        %v604 = vld [vmem:[%s601 + $0x10] sm:$0xff]
        %v605 = vld [vmem:[%s601 + $0x18] sm:$0xff]
        %v606 = vld [vmem:[%s601 + $0x20] sm:$0xff]
        %v607 = vld [vmem:[%s601 + $0x28] sm:$0xff]
        %v608 = vld [vmem:[%s601 + $0x30] sm:$0xff]
        %v609 = vld [vmem:[%s601 + $0x38] sm:$0xff]
        %v610 = vld [vmem:[%s601 + $0x40] sm:$0xff]
        %v611 = vld [vmem:[%s601 + $0x48] sm:$0xff]
        %v612 = vld [vmem:[%s601 + $0x50] sm:$0xff]
        %v613 = vld [vmem:[%s601 + $0x58] sm:$0xff]
        %v614 = vld [vmem:[%s601 + $0x60] sm:$0xff]
        %v615 = vld [vmem:[%s601 + $0x68] sm:$0xff]
        %v616 = vld [vmem:[%s601 + $0x70] sm:$0xff]
        %v617 = vld [vmem:[%s601 + $0x78] sm:$0xff]
        %618 = vmatpush.msra.mxu0 %v617
        %619 = vmatpush.msra.mxu0 %v616
        %620 = vmatpush.msra.mxu0 %v615
        %621 = vmatpush.msra.mxu0 %v614
        %622 = vmatpush.msra.mxu0 %v613
        %623 = vmatpush.msra.mxu0 %v612
        %624 = vmatpush.msra.mxu0 %v611
        %625 = vmatpush.msra.mxu0 %v610
        %626 = vmatpush.msra.mxu0 %v609
        %627 = vmatpush.msra.mxu0 %v608
        %628 = vmatpush.msra.mxu0 %v607
        %629 = vmatpush.msra.mxu0 %v606
        %630 = vmatpush.msra.mxu0 %v605
        %631 = vmatpush.msra.mxu0 %v604
        %632 = vmatpush.msra.mxu0 %v603
        %633 = vmatpush.msra.mxu0 %v602
        %634 = vmatmul.f32.gmra.mxu0 %v593
        %v635 = vpop.f32.mrf.mxu0
        %v636 = vadd.f32 0.0, %v635
        %637 = vmatmul.f32.gmra.mxu0 %v594
        %v638 = vpop.f32.mrf.mxu0
        %v639 = vadd.f32 0.0, %v638
        %640 = vmatmul.f32.gmra.mxu0 %v595
        %v641 = vpop.f32.mrf.mxu0
        %v642 = vadd.f32 0.0, %v641
        %643 = vmatmul.f32.gmra.mxu0 %v596
        %v644 = vpop.f32.mrf.mxu0
        %v645 = vadd.f32 0.0, %v644
        %646 = vmatmul.f32.gmra.mxu0 %v597
        %v647 = vpop.f32.mrf.mxu0
        %v648 = vadd.f32 0.0, %v647
        %649 = vmatmul.f32.gmra.mxu0 %v598
        %v650 = vpop.f32.mrf.mxu0
        %v651 = vadd.f32 0.0, %v650
        %652 = vmatmul.f32.gmra.mxu0 %v599
        %v653 = vpop.f32.mrf.mxu0
        %v654 = vadd.f32 0.0, %v653
        %655 = vmatmul.f32.gmra.mxu0 %v600
        %v656 = vpop.f32.mrf.mxu0
        %v657 = vadd.f32 0.0, %v656
        %658 = vdwg.mxu0
        %659 = vmatpush.msra.mxu0 %v592
        %660 = vmatpush.msra.mxu0 %v591
        %661 = vmatpush.msra.mxu0 %v590
        %662 = vmatpush.msra.mxu0 %v589
        %663 = vmatpush.msra.mxu0 %v588
        %664 = vmatpush.msra.mxu0 %v587
        %665 = vmatpush.msra.mxu0 %v586
        %666 = vmatpush.msra.mxu0 %v585
        %667 = vmatpush.msra.mxu0 %v584
        %668 = vmatpush.msra.mxu0 %v583
        %669 = vmatpush.msra.mxu0 %v582
        %670 = vmatpush.msra.mxu0 %v581
        %671 = vmatpush.msra.mxu0 %v580
        %672 = vmatpush.msra.mxu0 %v579
        %673 = vmatpush.msra.mxu0 %v578
        %674 = vmatpush.msra.mxu0 %v577
        %675 = vmatmul.f32.gmra.mxu0 %v569
        %v676 = vpop.f32.mrf.mxu0
        %v677 = vadd.f32 %v636, %v676
        %678 = vmatmul.f32.gmra.mxu0 %v570
        %v679 = vpop.f32.mrf.mxu0
        %v680 = vadd.f32 %v639, %v679
        %681 = vmatmul.f32.gmra.mxu0 %v571
        %v682 = vpop.f32.mrf.mxu0
        %v683 = vadd.f32 %v642, %v682
        %684 = vmatmul.f32.gmra.mxu0 %v572
        %v685 = vpop.f32.mrf.mxu0
        %v686 = vadd.f32 %v645, %v685
        %687 = vmatmul.f32.gmra.mxu0 %v573
        %v688 = vpop.f32.mrf.mxu0
        %v689 = vadd.f32 %v648, %v688
        %690 = vmatmul.f32.gmra.mxu0 %v574
        %v691 = vpop.f32.mrf.mxu0
        %v692 = vadd.f32 %v651, %v691
        %693 = vmatmul.f32.gmra.mxu0 %v575
        %v694 = vpop.f32.mrf.mxu0
        %v695 = vadd.f32 %v654, %v694
        %696 = vmatmul.f32.gmra.mxu0 %v576
        %v697 = vpop.f32.mrf.mxu0
        %v698 = vadd.f32 %v657, %v697
        %699 = vdwg.mxu0
        %v700 = vld [vmem:[#allocation2 + $0x9] sm:$0xff]
        %v701 = vld [vmem:[#allocation2 + $0x11] sm:$0xff]
        %v702 = vld [vmem:[#allocation2 + $0x19] sm:$0xff]
        %v703 = vld [vmem:[#allocation2 + $0x21] sm:$0xff]
        %v704 = vld [vmem:[#allocation2 + $0x29] sm:$0xff]
        %v705 = vld [vmem:[#allocation2 + $0x31] sm:$0xff]
        %v706 = vld [vmem:[#allocation2 + $0x39] sm:$0xff]
        %v707 = vld [vmem:[#allocation2 + $0x41] sm:$0xff]
        %vm708 = vcmp.lt.s32.totalorder %v529, 7
        %vm709 = vcmp.lt.s32.totalorder %v530, 7
        %vm710 = vcmp.lt.s32.totalorder %v531, 7
        %vm711 = vcmp.lt.s32.totalorder %v532, 7
        %vm712 = vcmp.lt.s32.totalorder %v533, 7
        %vm713 = vcmp.lt.s32.totalorder %v534, 7
        %vm714 = vcmp.lt.s32.totalorder %v535, 7
        %vm715 = vcmp.lt.s32.totalorder %v536, 7
        %v716 = vsel %vm708, 1, 0
        %v717 = vsel %vm709, 1, 0
        %v718 = vsel %vm710, 1, 0
        %v719 = vsel %vm711, 1, 0
        %v720 = vsel %vm712, 1, 0
        %v721 = vsel %vm713, 1, 0
        %v722 = vsel %vm714, 1, 0
        %v723 = vsel %vm715, 1, 0
        %vm724 = vcmp.eq.s32.totalorder %v716, 1
        %vm725 = vcmp.eq.s32.totalorder %v717, 1
        %vm726 = vcmp.eq.s32.totalorder %v718, 1
        %vm727 = vcmp.eq.s32.totalorder %v719, 1
        %vm728 = vcmp.eq.s32.totalorder %v720, 1
        %vm729 = vcmp.eq.s32.totalorder %v721, 1
        %vm730 = vcmp.eq.s32.totalorder %v722, 1
        %vm731 = vcmp.eq.s32.totalorder %v723, 1
        %v732 = vsel %vm724, %v700, 0.0
        %v733 = vsel %vm725, %v701, 0.0
        %v734 = vsel %vm726, %v702, 0.0
        %v735 = vsel %vm727, %v703, 0.0
        %v736 = vsel %vm728, %v704, 0.0
        %v737 = vsel %vm729, %v705, 0.0
        %v738 = vsel %vm730, %v706, 0.0
        %v739 = vsel %vm731, %v707, 0.0
        %s740 = scalar_lea.vmem [#allocation8], 256
        %v741 = vld [vmem:[%s740] sm:$0xff]
        %v742 = vld [vmem:[%s740 + $0x8] sm:$0xff]
        %v743 = vld [vmem:[%s740 + $0x10] sm:$0xff]
        %v744 = vld [vmem:[%s740 + $0x18] sm:$0xff]
        %v745 = vld [vmem:[%s740 + $0x20] sm:$0xff]
        %v746 = vld [vmem:[%s740 + $0x28] sm:$0xff]
        %v747 = vld [vmem:[%s740 + $0x30] sm:$0xff]
        %v748 = vld [vmem:[%s740 + $0x38] sm:$0xff]
        %v749 = vld [vmem:[%s740 + $0x40] sm:$0xff]
        %v750 = vld [vmem:[%s740 + $0x48] sm:$0xff]
        %v751 = vld [vmem:[%s740 + $0x50] sm:$0xff]
        %v752 = vld [vmem:[%s740 + $0x58] sm:$0xff]
        %v753 = vld [vmem:[%s740 + $0x60] sm:$0xff]
        %v754 = vld [vmem:[%s740 + $0x68] sm:$0xff]
        %v755 = vld [vmem:[%s740 + $0x70] sm:$0xff]
        %v756 = vld [vmem:[%s740 + $0x78] sm:$0xff]
        %757 = vmatpush.msra.mxu0 %v756
        %758 = vmatpush.msra.mxu0 %v755
        %759 = vmatpush.msra.mxu0 %v754
        %760 = vmatpush.msra.mxu0 %v753
        %761 = vmatpush.msra.mxu0 %v752
        %762 = vmatpush.msra.mxu0 %v751
        %763 = vmatpush.msra.mxu0 %v750
        %764 = vmatpush.msra.mxu0 %v749
        %765 = vmatpush.msra.mxu0 %v748
        %766 = vmatpush.msra.mxu0 %v747
        %767 = vmatpush.msra.mxu0 %v746
        %768 = vmatpush.msra.mxu0 %v745
        %769 = vmatpush.msra.mxu0 %v744
        %770 = vmatpush.msra.mxu0 %v743
        %771 = vmatpush.msra.mxu0 %v742
        %772 = vmatpush.msra.mxu0 %v741
        %773 = vmatmul.f32.gmra.mxu0 %v732
        %v774 = vpop.f32.mrf.mxu0
        %v775 = vadd.f32 0.0, %v774
        %776 = vmatmul.f32.gmra.mxu0 %v733
        %v777 = vpop.f32.mrf.mxu0
        %v778 = vadd.f32 0.0, %v777
        %779 = vmatmul.f32.gmra.mxu0 %v734
        %v780 = vpop.f32.mrf.mxu0
        %v781 = vadd.f32 0.0, %v780
        %782 = vmatmul.f32.gmra.mxu0 %v735
        %v783 = vpop.f32.mrf.mxu0
        %v784 = vadd.f32 0.0, %v783
        %785 = vmatmul.f32.gmra.mxu0 %v736
        %v786 = vpop.f32.mrf.mxu0
        %v787 = vadd.f32 0.0, %v786
        %788 = vmatmul.f32.gmra.mxu0 %v737
        %v789 = vpop.f32.mrf.mxu0
        %v790 = vadd.f32 0.0, %v789
        %791 = vmatmul.f32.gmra.mxu0 %v738
        %v792 = vpop.f32.mrf.mxu0
        %v793 = vadd.f32 0.0, %v792
        %794 = vmatmul.f32.gmra.mxu0 %v739
        %v795 = vpop.f32.mrf.mxu0
        %v796 = vadd.f32 0.0, %v795
        %797 = vdwg.mxu0
        %v798 = vadd.f32 %v677, %v775
        %v799 = vadd.f32 %v680, %v778
        %v800 = vadd.f32 %v683, %v781
        %v801 = vadd.f32 %v686, %v784
        %v802 = vadd.f32 %v689, %v787
        %v803 = vadd.f32 %v692, %v790
        %v804 = vadd.f32 %v695, %v793
        %v805 = vadd.f32 %v698, %v796
        %v806 = vld [vmem:[#allocation2 + $0xf] sm:$0xff]
        %v807 = vld [vmem:[#allocation2 + $0x17] sm:$0xff]
        %v808 = vld [vmem:[#allocation2 + $0x1f] sm:$0xff]
        %v809 = vld [vmem:[#allocation2 + $0x27] sm:$0xff]
        %v810 = vld [vmem:[#allocation2 + $0x2f] sm:$0xff]
        %v811 = vld [vmem:[#allocation2 + $0x37] sm:$0xff]
        %v812 = vld [vmem:[#allocation2 + $0x3f] sm:$0xff]
        %v813 = vld [vmem:[#allocation2 + $0x47] sm:$0xff]
        %v814 = vsel %vm561, %v806, 0.0
        %v815 = vsel %vm562, %v807, 0.0
        %v816 = vsel %vm563, %v808, 0.0
        %v817 = vsel %vm564, %v809, 0.0
        %v818 = vsel %vm565, %v810, 0.0
        %v819 = vsel %vm566, %v811, 0.0
        %v820 = vsel %vm567, %v812, 0.0
        %v821 = vsel %vm568, %v813, 0.0
        %s822 = scalar_lea.vmem [#allocation8], 384
        %v823 = vld [vmem:[%s822] sm:$0xff]
        %v824 = vld [vmem:[%s822 + $0x8] sm:$0xff]
        %v825 = vld [vmem:[%s822 + $0x10] sm:$0xff]
        %v826 = vld [vmem:[%s822 + $0x18] sm:$0xff]
        %v827 = vld [vmem:[%s822 + $0x20] sm:$0xff]
        %v828 = vld [vmem:[%s822 + $0x28] sm:$0xff]
        %v829 = vld [vmem:[%s822 + $0x30] sm:$0xff]
        %v830 = vld [vmem:[%s822 + $0x38] sm:$0xff]
        %v831 = vld [vmem:[%s822 + $0x40] sm:$0xff]
        %v832 = vld [vmem:[%s822 + $0x48] sm:$0xff]
        %v833 = vld [vmem:[%s822 + $0x50] sm:$0xff]
        %v834 = vld [vmem:[%s822 + $0x58] sm:$0xff]
        %v835 = vld [vmem:[%s822 + $0x60] sm:$0xff]
        %v836 = vld [vmem:[%s822 + $0x68] sm:$0xff]
        %v837 = vld [vmem:[%s822 + $0x70] sm:$0xff]
        %v838 = vld [vmem:[%s822 + $0x78] sm:$0xff]
        %839 = vmatpush.msra.mxu0 %v838
        %840 = vmatpush.msra.mxu0 %v837
        %841 = vmatpush.msra.mxu0 %v836
        %842 = vmatpush.msra.mxu0 %v835
        %843 = vmatpush.msra.mxu0 %v834
        %844 = vmatpush.msra.mxu0 %v833
        %845 = vmatpush.msra.mxu0 %v832
        %846 = vmatpush.msra.mxu0 %v831
        %847 = vmatpush.msra.mxu0 %v830
        %848 = vmatpush.msra.mxu0 %v829
        %849 = vmatpush.msra.mxu0 %v828
        %850 = vmatpush.msra.mxu0 %v827
        %851 = vmatpush.msra.mxu0 %v826
        %852 = vmatpush.msra.mxu0 %v825
        %853 = vmatpush.msra.mxu0 %v824
        %854 = vmatpush.msra.mxu0 %v823
        %855 = vmatmul.f32.gmra.mxu0 %v814
        %v856 = vpop.f32.mrf.mxu0
        %v857 = vadd.f32 0.0, %v856
        %858 = vmatmul.f32.gmra.mxu0 %v815
        %v859 = vpop.f32.mrf.mxu0
        %v860 = vadd.f32 0.0, %v859
        %861 = vmatmul.f32.gmra.mxu0 %v816
        %v862 = vpop.f32.mrf.mxu0
        %v863 = vadd.f32 0.0, %v862
        %864 = vmatmul.f32.gmra.mxu0 %v817
        %v865 = vpop.f32.mrf.mxu0
        %v866 = vadd.f32 0.0, %v865
        %867 = vmatmul.f32.gmra.mxu0 %v818
        %v868 = vpop.f32.mrf.mxu0
        %v869 = vadd.f32 0.0, %v868
        %870 = vmatmul.f32.gmra.mxu0 %v819
        %v871 = vpop.f32.mrf.mxu0
        %v872 = vadd.f32 0.0, %v871
        %873 = vmatmul.f32.gmra.mxu0 %v820
        %v874 = vpop.f32.mrf.mxu0
        %v875 = vadd.f32 0.0, %v874
        %876 = vmatmul.f32.gmra.mxu0 %v821
        %v877 = vpop.f32.mrf.mxu0
        %v878 = vadd.f32 0.0, %v877
        %879 = vdwg.mxu0
        %v880 = vadd.f32 %v798, %v857
        %v881 = vadd.f32 %v799, %v860
        %v882 = vadd.f32 %v800, %v863
        %v883 = vadd.f32 %v801, %v866
        %v884 = vadd.f32 %v802, %v869
        %v885 = vadd.f32 %v803, %v872
        %v886 = vadd.f32 %v804, %v875
        %v887 = vadd.f32 %v805, %v878
        %v888 = vld [vmem:[#allocation2 + $0x10] sm:$0xff]
        %v889 = vld [vmem:[#allocation2 + $0x18] sm:$0xff]
        %v890 = vld [vmem:[#allocation2 + $0x20] sm:$0xff]
        %v891 = vld [vmem:[#allocation2 + $0x28] sm:$0xff]
        %v892 = vld [vmem:[#allocation2 + $0x30] sm:$0xff]
        %v893 = vld [vmem:[#allocation2 + $0x38] sm:$0xff]
        %v894 = vld [vmem:[#allocation2 + $0x40] sm:$0xff]
        %v895 = vld [vmem:[#allocation2 + $0x48] sm:$0xff]
        %s896 = scalar_lea.vmem [#allocation8], 512
        %v897 = vld [vmem:[%s896] sm:$0xff]
        %v898 = vld [vmem:[%s896 + $0x8] sm:$0xff]
        %v899 = vld [vmem:[%s896 + $0x10] sm:$0xff]
        %v900 = vld [vmem:[%s896 + $0x18] sm:$0xff]
        %v901 = vld [vmem:[%s896 + $0x20] sm:$0xff]
        %v902 = vld [vmem:[%s896 + $0x28] sm:$0xff]
        %v903 = vld [vmem:[%s896 + $0x30] sm:$0xff]
        %v904 = vld [vmem:[%s896 + $0x38] sm:$0xff]
        %v905 = vld [vmem:[%s896 + $0x40] sm:$0xff]
        %v906 = vld [vmem:[%s896 + $0x48] sm:$0xff]
        %v907 = vld [vmem:[%s896 + $0x50] sm:$0xff]
        %v908 = vld [vmem:[%s896 + $0x58] sm:$0xff]
        %v909 = vld [vmem:[%s896 + $0x60] sm:$0xff]
        %v910 = vld [vmem:[%s896 + $0x68] sm:$0xff]
        %v911 = vld [vmem:[%s896 + $0x70] sm:$0xff]
        %v912 = vld [vmem:[%s896 + $0x78] sm:$0xff]
        %913 = vmatpush.msra.mxu0 %v912
        %914 = vmatpush.msra.mxu0 %v911
        %915 = vmatpush.msra.mxu0 %v910
        %916 = vmatpush.msra.mxu0 %v909
        %917 = vmatpush.msra.mxu0 %v908
        %918 = vmatpush.msra.mxu0 %v907
        %919 = vmatpush.msra.mxu0 %v906
        %920 = vmatpush.msra.mxu0 %v905
        %921 = vmatpush.msra.mxu0 %v904
        %922 = vmatpush.msra.mxu0 %v903
        %923 = vmatpush.msra.mxu0 %v902
        %924 = vmatpush.msra.mxu0 %v901
        %925 = vmatpush.msra.mxu0 %v900
        %926 = vmatpush.msra.mxu0 %v899
        %927 = vmatpush.msra.mxu0 %v898
        %928 = vmatpush.msra.mxu0 %v897
        %929 = vmatmul.f32.gmra.mxu0 %v888
        %v930 = vpop.f32.mrf.mxu0
        %v931 = vadd.f32 0.0, %v930
        %932 = vmatmul.f32.gmra.mxu0 %v889
        %v933 = vpop.f32.mrf.mxu0
        %v934 = vadd.f32 0.0, %v933
        %935 = vmatmul.f32.gmra.mxu0 %v890
        %v936 = vpop.f32.mrf.mxu0
        %v937 = vadd.f32 0.0, %v936
        %938 = vmatmul.f32.gmra.mxu0 %v891
        %v939 = vpop.f32.mrf.mxu0
        %v940 = vadd.f32 0.0, %v939
        %941 = vmatmul.f32.gmra.mxu0 %v892
        %v942 = vpop.f32.mrf.mxu0
        %v943 = vadd.f32 0.0, %v942
        %944 = vmatmul.f32.gmra.mxu0 %v893
        %v945 = vpop.f32.mrf.mxu0
        %v946 = vadd.f32 0.0, %v945
        %947 = vmatmul.f32.gmra.mxu0 %v894
        %v948 = vpop.f32.mrf.mxu0
        %v949 = vadd.f32 0.0, %v948
        %950 = vmatmul.f32.gmra.mxu0 %v895
        %v951 = vpop.f32.mrf.mxu0
        %v952 = vadd.f32 0.0, %v951
        %953 = vdwg.mxu0
        %v954 = vadd.f32 %v880, %v931
        %v955 = vadd.f32 %v881, %v934
        %v956 = vadd.f32 %v882, %v937
        %v957 = vadd.f32 %v883, %v940
        %v958 = vadd.f32 %v884, %v943
        %v959 = vadd.f32 %v885, %v946
        %v960 = vadd.f32 %v886, %v949
        %v961 = vadd.f32 %v887, %v952
        %v962 = vld [vmem:[#allocation2 + $0x11] sm:$0xff]
        %v963 = vld [vmem:[#allocation2 + $0x19] sm:$0xff]
        %v964 = vld [vmem:[#allocation2 + $0x21] sm:$0xff]
        %v965 = vld [vmem:[#allocation2 + $0x29] sm:$0xff]
        %v966 = vld [vmem:[#allocation2 + $0x31] sm:$0xff]
        %v967 = vld [vmem:[#allocation2 + $0x39] sm:$0xff]
        %v968 = vld [vmem:[#allocation2 + $0x41] sm:$0xff]
        %v969 = vld [vmem:[#allocation2 + $0x49] sm:$0xff]
        %v970 = vsel %vm724, %v962, 0.0
        %v971 = vsel %vm725, %v963, 0.0
        %v972 = vsel %vm726, %v964, 0.0
        %v973 = vsel %vm727, %v965, 0.0
        %v974 = vsel %vm728, %v966, 0.0
        %v975 = vsel %vm729, %v967, 0.0
        %v976 = vsel %vm730, %v968, 0.0
        %v977 = vsel %vm731, %v969, 0.0
        %s978 = scalar_lea.vmem [#allocation8], 640
        %v979 = vld [vmem:[%s978] sm:$0xff]
        %v980 = vld [vmem:[%s978 + $0x8] sm:$0xff]
        %v981 = vld [vmem:[%s978 + $0x10] sm:$0xff]
        %v982 = vld [vmem:[%s978 + $0x18] sm:$0xff]
        %v983 = vld [vmem:[%s978 + $0x20] sm:$0xff]
        %v984 = vld [vmem:[%s978 + $0x28] sm:$0xff]
        %v985 = vld [vmem:[%s978 + $0x30] sm:$0xff]
        %v986 = vld [vmem:[%s978 + $0x38] sm:$0xff]
        %v987 = vld [vmem:[%s978 + $0x40] sm:$0xff]
        %v988 = vld [vmem:[%s978 + $0x48] sm:$0xff]
        %v989 = vld [vmem:[%s978 + $0x50] sm:$0xff]
        %v990 = vld [vmem:[%s978 + $0x58] sm:$0xff]
        %v991 = vld [vmem:[%s978 + $0x60] sm:$0xff]
        %v992 = vld [vmem:[%s978 + $0x68] sm:$0xff]
        %v993 = vld [vmem:[%s978 + $0x70] sm:$0xff]
        %v994 = vld [vmem:[%s978 + $0x78] sm:$0xff]
        %995 = vmatpush.msra.mxu0 %v994
        %996 = vmatpush.msra.mxu0 %v993
        %997 = vmatpush.msra.mxu0 %v992
        %998 = vmatpush.msra.mxu0 %v991
        %999 = vmatpush.msra.mxu0 %v990
        %1000 = vmatpush.msra.mxu0 %v989
        %1001 = vmatpush.msra.mxu0 %v988
        %1002 = vmatpush.msra.mxu0 %v987
        %1003 = vmatpush.msra.mxu0 %v986
        %1004 = vmatpush.msra.mxu0 %v985
        %1005 = vmatpush.msra.mxu0 %v984
        %1006 = vmatpush.msra.mxu0 %v983
        %1007 = vmatpush.msra.mxu0 %v982
        %1008 = vmatpush.msra.mxu0 %v981
        %1009 = vmatpush.msra.mxu0 %v980
        %1010 = vmatpush.msra.mxu0 %v979
        %1011 = vmatmul.f32.gmra.mxu0 %v970
        %v1012 = vpop.f32.mrf.mxu0
        %v1013 = vadd.f32 0.0, %v1012
        %1014 = vmatmul.f32.gmra.mxu0 %v971
        %v1015 = vpop.f32.mrf.mxu0
        %v1016 = vadd.f32 0.0, %v1015
        %1017 = vmatmul.f32.gmra.mxu0 %v972
        %v1018 = vpop.f32.mrf.mxu0
        %v1019 = vadd.f32 0.0, %v1018
        %1020 = vmatmul.f32.gmra.mxu0 %v973
        %v1021 = vpop.f32.mrf.mxu0
        %v1022 = vadd.f32 0.0, %v1021
        %1023 = vmatmul.f32.gmra.mxu0 %v974
        %v1024 = vpop.f32.mrf.mxu0
        %v1025 = vadd.f32 0.0, %v1024
        %1026 = vmatmul.f32.gmra.mxu0 %v975
        %v1027 = vpop.f32.mrf.mxu0
        %v1028 = vadd.f32 0.0, %v1027
        %1029 = vmatmul.f32.gmra.mxu0 %v976
        %v1030 = vpop.f32.mrf.mxu0
        %v1031 = vadd.f32 0.0, %v1030
        %1032 = vmatmul.f32.gmra.mxu0 %v977
        %v1033 = vpop.f32.mrf.mxu0
        %v1034 = vadd.f32 0.0, %v1033
        %1035 = vdwg.mxu0
        %v1036 = vadd.f32 %v954, %v1013
        %v1037 = vadd.f32 %v955, %v1016
        %v1038 = vadd.f32 %v956, %v1019
        %v1039 = vadd.f32 %v957, %v1022
        %v1040 = vadd.f32 %v958, %v1025
        %v1041 = vadd.f32 %v959, %v1028
        %v1042 = vadd.f32 %v960, %v1031
        %v1043 = vadd.f32 %v961, %v1034
        %v1044 = vld [vmem:[#allocation2 + $0x17] sm:$0xff]
        %v1045 = vld [vmem:[#allocation2 + $0x1f] sm:$0xff]
        %v1046 = vld [vmem:[#allocation2 + $0x27] sm:$0xff]
        %v1047 = vld [vmem:[#allocation2 + $0x2f] sm:$0xff]
        %v1048 = vld [vmem:[#allocation2 + $0x37] sm:$0xff]
        %v1049 = vld [vmem:[#allocation2 + $0x3f] sm:$0xff]
        %v1050 = vld [vmem:[#allocation2 + $0x47] sm:$0xff]
        %v1051 = vld [vmem:[#allocation2 + $0x4f] sm:$0xff]
        %v1052 = vsel %vm561, %v1044, 0.0
        %v1053 = vsel %vm562, %v1045, 0.0
        %v1054 = vsel %vm563, %v1046, 0.0
        %v1055 = vsel %vm564, %v1047, 0.0
        %v1056 = vsel %vm565, %v1048, 0.0
        %v1057 = vsel %vm566, %v1049, 0.0
        %v1058 = vsel %vm567, %v1050, 0.0
        %v1059 = vsel %vm568, %v1051, 0.0
        %s1060 = scalar_lea.vmem [#allocation8], 768
        %v1061 = vld [vmem:[%s1060] sm:$0xff]
        %v1062 = vld [vmem:[%s1060 + $0x8] sm:$0xff]
        %v1063 = vld [vmem:[%s1060 + $0x10] sm:$0xff]
        %v1064 = vld [vmem:[%s1060 + $0x18] sm:$0xff]
        %v1065 = vld [vmem:[%s1060 + $0x20] sm:$0xff]
        %v1066 = vld [vmem:[%s1060 + $0x28] sm:$0xff]
        %v1067 = vld [vmem:[%s1060 + $0x30] sm:$0xff]
        %v1068 = vld [vmem:[%s1060 + $0x38] sm:$0xff]
        %v1069 = vld [vmem:[%s1060 + $0x40] sm:$0xff]
        %v1070 = vld [vmem:[%s1060 + $0x48] sm:$0xff]
        %v1071 = vld [vmem:[%s1060 + $0x50] sm:$0xff]
        %v1072 = vld [vmem:[%s1060 + $0x58] sm:$0xff]
        %v1073 = vld [vmem:[%s1060 + $0x60] sm:$0xff]
        %v1074 = vld [vmem:[%s1060 + $0x68] sm:$0xff]
        %v1075 = vld [vmem:[%s1060 + $0x70] sm:$0xff]
        %v1076 = vld [vmem:[%s1060 + $0x78] sm:$0xff]
        %1077 = vmatpush.msra.mxu0 %v1076
        %1078 = vmatpush.msra.mxu0 %v1075
        %1079 = vmatpush.msra.mxu0 %v1074
        %1080 = vmatpush.msra.mxu0 %v1073
        %1081 = vmatpush.msra.mxu0 %v1072
        %1082 = vmatpush.msra.mxu0 %v1071
        %1083 = vmatpush.msra.mxu0 %v1070
        %1084 = vmatpush.msra.mxu0 %v1069
        %1085 = vmatpush.msra.mxu0 %v1068
        %1086 = vmatpush.msra.mxu0 %v1067
        %1087 = vmatpush.msra.mxu0 %v1066
        %1088 = vmatpush.msra.mxu0 %v1065
        %1089 = vmatpush.msra.mxu0 %v1064
        %1090 = vmatpush.msra.mxu0 %v1063
        %1091 = vmatpush.msra.mxu0 %v1062
        %1092 = vmatpush.msra.mxu0 %v1061
        %1093 = vmatmul.f32.gmra.mxu0 %v1052
        %v1094 = vpop.f32.mrf.mxu0
        %v1095 = vadd.f32 0.0, %v1094
        %1096 = vmatmul.f32.gmra.mxu0 %v1053
        %v1097 = vpop.f32.mrf.mxu0
        %v1098 = vadd.f32 0.0, %v1097
        %1099 = vmatmul.f32.gmra.mxu0 %v1054
        %v1100 = vpop.f32.mrf.mxu0
        %v1101 = vadd.f32 0.0, %v1100
        %1102 = vmatmul.f32.gmra.mxu0 %v1055
        %v1103 = vpop.f32.mrf.mxu0
        %v1104 = vadd.f32 0.0, %v1103
        %1105 = vmatmul.f32.gmra.mxu0 %v1056
        %v1106 = vpop.f32.mrf.mxu0
        %v1107 = vadd.f32 0.0, %v1106
        %1108 = vmatmul.f32.gmra.mxu0 %v1057
        %v1109 = vpop.f32.mrf.mxu0
        %v1110 = vadd.f32 0.0, %v1109
        %1111 = vmatmul.f32.gmra.mxu0 %v1058
        %v1112 = vpop.f32.mrf.mxu0
        %v1113 = vadd.f32 0.0, %v1112
        %1114 = vmatmul.f32.gmra.mxu0 %v1059
        %v1115 = vpop.f32.mrf.mxu0
        %v1116 = vadd.f32 0.0, %v1115
        %1117 = vdwg.mxu0
        %v1118 = vadd.f32 %v1036, %v1095
        %v1119 = vadd.f32 %v1037, %v1098
        %v1120 = vadd.f32 %v1038, %v1101
        %v1121 = vadd.f32 %v1039, %v1104
        %v1122 = vadd.f32 %v1040, %v1107
        %v1123 = vadd.f32 %v1041, %v1110
        %v1124 = vadd.f32 %v1042, %v1113
        %v1125 = vadd.f32 %v1043, %v1116
        %v1126 = vld [vmem:[#allocation2 + $0x18] sm:$0xff]
        %v1127 = vld [vmem:[#allocation2 + $0x20] sm:$0xff]
        %v1128 = vld [vmem:[#allocation2 + $0x28] sm:$0xff]
        %v1129 = vld [vmem:[#allocation2 + $0x30] sm:$0xff]
        %v1130 = vld [vmem:[#allocation2 + $0x38] sm:$0xff]
        %v1131 = vld [vmem:[#allocation2 + $0x40] sm:$0xff]
        %v1132 = vld [vmem:[#allocation2 + $0x48] sm:$0xff]
        %v1133 = vld [vmem:[#allocation2 + $0x50] sm:$0xff]
        %s1134 = scalar_lea.vmem [#allocation8], 896
        %v1135 = vld [vmem:[%s1134] sm:$0xff]
        %v1136 = vld [vmem:[%s1134 + $0x8] sm:$0xff]
        %v1137 = vld [vmem:[%s1134 + $0x10] sm:$0xff]
        %v1138 = vld [vmem:[%s1134 + $0x18] sm:$0xff]
        %v1139 = vld [vmem:[%s1134 + $0x20] sm:$0xff]
        %v1140 = vld [vmem:[%s1134 + $0x28] sm:$0xff]
        %v1141 = vld [vmem:[%s1134 + $0x30] sm:$0xff]
        %v1142 = vld [vmem:[%s1134 + $0x38] sm:$0xff]
        %v1143 = vld [vmem:[%s1134 + $0x40] sm:$0xff]
        %v1144 = vld [vmem:[%s1134 + $0x48] sm:$0xff]
        %v1145 = vld [vmem:[%s1134 + $0x50] sm:$0xff]
        %v1146 = vld [vmem:[%s1134 + $0x58] sm:$0xff]
        %v1147 = vld [vmem:[%s1134 + $0x60] sm:$0xff]
        %v1148 = vld [vmem:[%s1134 + $0x68] sm:$0xff]
        %v1149 = vld [vmem:[%s1134 + $0x70] sm:$0xff]
        %v1150 = vld [vmem:[%s1134 + $0x78] sm:$0xff]
        %1151 = vmatpush.msra.mxu0 %v1150
        %1152 = vmatpush.msra.mxu0 %v1149
        %1153 = vmatpush.msra.mxu0 %v1148
        %1154 = vmatpush.msra.mxu0 %v1147
        %1155 = vmatpush.msra.mxu0 %v1146
        %1156 = vmatpush.msra.mxu0 %v1145
        %1157 = vmatpush.msra.mxu0 %v1144
        %1158 = vmatpush.msra.mxu0 %v1143
        %1159 = vmatpush.msra.mxu0 %v1142
        %1160 = vmatpush.msra.mxu0 %v1141
        %1161 = vmatpush.msra.mxu0 %v1140
        %1162 = vmatpush.msra.mxu0 %v1139
        %1163 = vmatpush.msra.mxu0 %v1138
        %1164 = vmatpush.msra.mxu0 %v1137
        %1165 = vmatpush.msra.mxu0 %v1136
        %1166 = vmatpush.msra.mxu0 %v1135
        %1167 = vmatmul.f32.gmra.mxu0 %v1126
        %v1168 = vpop.f32.mrf.mxu0
        %v1169 = vadd.f32 0.0, %v1168
        %1170 = vmatmul.f32.gmra.mxu0 %v1127
        %v1171 = vpop.f32.mrf.mxu0
        %v1172 = vadd.f32 0.0, %v1171
        %1173 = vmatmul.f32.gmra.mxu0 %v1128
        %v1174 = vpop.f32.mrf.mxu0
        %v1175 = vadd.f32 0.0, %v1174
        %1176 = vmatmul.f32.gmra.mxu0 %v1129
        %v1177 = vpop.f32.mrf.mxu0
        %v1178 = vadd.f32 0.0, %v1177
        %1179 = vmatmul.f32.gmra.mxu0 %v1130
        %v1180 = vpop.f32.mrf.mxu0
        %v1181 = vadd.f32 0.0, %v1180
        %1182 = vmatmul.f32.gmra.mxu0 %v1131
        %v1183 = vpop.f32.mrf.mxu0
        %v1184 = vadd.f32 0.0, %v1183
        %1185 = vmatmul.f32.gmra.mxu0 %v1132
        %v1186 = vpop.f32.mrf.mxu0
        %v1187 = vadd.f32 0.0, %v1186
        %1188 = vmatmul.f32.gmra.mxu0 %v1133
        %v1189 = vpop.f32.mrf.mxu0
        %v1190 = vadd.f32 0.0, %v1189
        %1191 = vdwg.mxu0
        %v1192 = vadd.f32 %v1118, %v1169
        %v1193 = vadd.f32 %v1119, %v1172
        %v1194 = vadd.f32 %v1120, %v1175
        %v1195 = vadd.f32 %v1121, %v1178
        %v1196 = vadd.f32 %v1122, %v1181
        %v1197 = vadd.f32 %v1123, %v1184
        %v1198 = vadd.f32 %v1124, %v1187
        %v1199 = vadd.f32 %v1125, %v1190
        %v1200 = vld [vmem:[#allocation2 + $0x19] sm:$0xff]
        %v1201 = vld [vmem:[#allocation2 + $0x21] sm:$0xff]
        %v1202 = vld [vmem:[#allocation2 + $0x29] sm:$0xff]
        %v1203 = vld [vmem:[#allocation2 + $0x31] sm:$0xff]
        %v1204 = vld [vmem:[#allocation2 + $0x39] sm:$0xff]
        %v1205 = vld [vmem:[#allocation2 + $0x41] sm:$0xff]
        %v1206 = vld [vmem:[#allocation2 + $0x49] sm:$0xff]
        %v1207 = vld [vmem:[#allocation2 + $0x51] sm:$0xff]
        %v1208 = vsel %vm724, %v1200, 0.0
        %v1209 = vsel %vm725, %v1201, 0.0
        %v1210 = vsel %vm726, %v1202, 0.0
        %v1211 = vsel %vm727, %v1203, 0.0
        %v1212 = vsel %vm728, %v1204, 0.0
        %v1213 = vsel %vm729, %v1205, 0.0
        %v1214 = vsel %vm730, %v1206, 0.0
        %v1215 = vsel %vm731, %v1207, 0.0
        %s1216 = scalar_lea.vmem [#allocation8], 1024
        %v1217 = vld [vmem:[%s1216] sm:$0xff]
        %v1218 = vld [vmem:[%s1216 + $0x8] sm:$0xff]
        %v1219 = vld [vmem:[%s1216 + $0x10] sm:$0xff]
        %v1220 = vld [vmem:[%s1216 + $0x18] sm:$0xff]
        %v1221 = vld [vmem:[%s1216 + $0x20] sm:$0xff]
        %v1222 = vld [vmem:[%s1216 + $0x28] sm:$0xff]
        %v1223 = vld [vmem:[%s1216 + $0x30] sm:$0xff]
        %v1224 = vld [vmem:[%s1216 + $0x38] sm:$0xff]
        %v1225 = vld [vmem:[%s1216 + $0x40] sm:$0xff]
        %v1226 = vld [vmem:[%s1216 + $0x48] sm:$0xff]
        %v1227 = vld [vmem:[%s1216 + $0x50] sm:$0xff]
        %v1228 = vld [vmem:[%s1216 + $0x58] sm:$0xff]
        %v1229 = vld [vmem:[%s1216 + $0x60] sm:$0xff]
        %v1230 = vld [vmem:[%s1216 + $0x68] sm:$0xff]
        %v1231 = vld [vmem:[%s1216 + $0x70] sm:$0xff]
        %v1232 = vld [vmem:[%s1216 + $0x78] sm:$0xff]
        %1233 = vmatpush.msra.mxu0 %v1232
        %1234 = vmatpush.msra.mxu0 %v1231
        %1235 = vmatpush.msra.mxu0 %v1230
        %1236 = vmatpush.msra.mxu0 %v1229
        %1237 = vmatpush.msra.mxu0 %v1228
        %1238 = vmatpush.msra.mxu0 %v1227
        %1239 = vmatpush.msra.mxu0 %v1226
        %1240 = vmatpush.msra.mxu0 %v1225
        %1241 = vmatpush.msra.mxu0 %v1224
        %1242 = vmatpush.msra.mxu0 %v1223
        %1243 = vmatpush.msra.mxu0 %v1222
        %1244 = vmatpush.msra.mxu0 %v1221
        %1245 = vmatpush.msra.mxu0 %v1220
        %1246 = vmatpush.msra.mxu0 %v1219
        %1247 = vmatpush.msra.mxu0 %v1218
        %1248 = vmatpush.msra.mxu0 %v1217
        %1249 = vmatmul.f32.gmra.mxu0 %v1208
        %v1250 = vpop.f32.mrf.mxu0
        %v1251 = vadd.f32 0.0, %v1250
        %1252 = vmatmul.f32.gmra.mxu0 %v1209
        %v1253 = vpop.f32.mrf.mxu0
        %v1254 = vadd.f32 0.0, %v1253
        %1255 = vmatmul.f32.gmra.mxu0 %v1210
        %v1256 = vpop.f32.mrf.mxu0
        %v1257 = vadd.f32 0.0, %v1256
        %1258 = vmatmul.f32.gmra.mxu0 %v1211
        %v1259 = vpop.f32.mrf.mxu0
        %v1260 = vadd.f32 0.0, %v1259
        %1261 = vmatmul.f32.gmra.mxu0 %v1212
        %v1262 = vpop.f32.mrf.mxu0
        %v1263 = vadd.f32 0.0, %v1262
        %1264 = vmatmul.f32.gmra.mxu0 %v1213
        %v1265 = vpop.f32.mrf.mxu0
        %v1266 = vadd.f32 0.0, %v1265
        %1267 = vmatmul.f32.gmra.mxu0 %v1214
        %v1268 = vpop.f32.mrf.mxu0
        %v1269 = vadd.f32 0.0, %v1268
        %1270 = vmatmul.f32.gmra.mxu0 %v1215
        %v1271 = vpop.f32.mrf.mxu0
        %v1272 = vadd.f32 0.0, %v1271
        %1273 = vdwg.mxu0
        %v1274 = vadd.f32 %v1192, %v1251
        %v1275 = vadd.f32 %v1193, %v1254
        %v1276 = vadd.f32 %v1194, %v1257
        %v1277 = vadd.f32 %v1195, %v1260
        %v1278 = vadd.f32 %v1196, %v1263
        %v1279 = vadd.f32 %v1197, %v1266
        %v1280 = vadd.f32 %v1198, %v1269
        %v1281 = vadd.f32 %v1199, %v1272
        %v1282 = vld [vmem:[%s4] sm:$0x1]
        %v1284 = vperm.slane %v1282, 0
        %v1286 = vadd.f32 %v1274, %v1284
        %v1287 = vadd.f32 %v1275, %v1284
        %v1288 = vadd.f32 %v1276, %v1284
        %v1289 = vadd.f32 %v1277, %v1284
        %v1290 = vadd.f32 %v1278, %v1284
        %v1291 = vadd.f32 %v1279, %v1284
        %v1292 = vadd.f32 %v1280, %v1284
        %v1293 = vadd.f32 %v1281, %v1284
        %v1294 = vmax.f32 %v1286, 0.0
        %v1295 = vmax.f32 %v1287, 0.0
        %v1296 = vmax.f32 %v1288, 0.0
        %v1297 = vmax.f32 %v1289, 0.0
        %v1298 = vmax.f32 %v1290, 0.0
        %v1299 = vmax.f32 %v1291, 0.0
        %v1300 = vmax.f32 %v1292, 0.0
        %v1301 = vmax.f32 %v1293, 0.0
        %1302 = vxpose.xlu0.b32.start [1/16] %v1294, 128
        %1303 = vxpose.xlu0.b32.cont [2/16] %v1295, 128
        %1304 = vxpose.xlu0.b32.cont [3/16] %v1296, 128
        %1305 = vxpose.xlu0.b32.cont [4/16] %v1297, 128
        %1306 = vxpose.xlu0.b32.cont [5/16] %v1298, 128
        %1307 = vxpose.xlu0.b32.cont [6/16] %v1299, 128
        %1308 = vxpose.xlu0.b32.cont [7/16] %v1300, 128
        %1309 = vxpose.xlu0.b32.cont [8/16] %v1301, 128
        %1310 = vxpose.xlu0.b32.cont [9/16] 0.0, 128
        %1311 = vxpose.xlu0.b32.cont [10/16] 0.0, 128
        %1312 = vxpose.xlu0.b32.cont [11/16] 0.0, 128
        %1313 = vxpose.xlu0.b32.cont [12/16] 0.0, 128
        %1314 = vxpose.xlu0.b32.cont [13/16] 0.0, 128
        %1315 = vxpose.xlu0.b32.cont [14/16] 0.0, 128
        %1316 = vxpose.xlu0.b32.cont [15/16] 0.0, 128
        %1317 = vxpose.xlu0.b32.end [16/16] 0.0, 128
        %v1318 = vpop.trf.xlu0
        %v1319 = vpop.trf.xlu0
        %v1320 = vpop.trf.xlu0
        %v1321 = vpop.trf.xlu0
        %v1322 = vpop.trf.xlu0
        %v1323 = vpop.trf.xlu0
        %v1324 = vpop.trf.xlu0
        %v1325 = vpop.trf.xlu0
        %v1326 = vpop.trf.xlu0
        %v1327 = vpop.trf.xlu0
        %v1328 = vpop.trf.xlu0
        %v1329 = vpop.trf.xlu0
        %v1330 = vpop.trf.xlu0
        %v1331 = vpop.trf.xlu0
        %v1332 = vpop.trf.xlu0
        %v1333 = vpop.trf.xlu0
        %1334 = vst.msk [vmem:[%s317] sm:$0xff] %vm338, %v1318
        %1335 = vst.msk [vmem:[%s317 + $0x8] sm:$0xff] %vm338, %v1319
        %1336 = vst.msk [vmem:[%s317 + $0x10] sm:$0xff] %vm338, %v1320
        %1337 = vst.msk [vmem:[%s317 + $0x18] sm:$0xff] %vm338, %v1321
        %1338 = vst.msk [vmem:[%s317 + $0x20] sm:$0xff] %vm338, %v1322
        %1339 = vst.msk [vmem:[%s317 + $0x28] sm:$0xff] %vm338, %v1323
        %1340 = vst.msk [vmem:[%s317 + $0x30] sm:$0xff] %vm338, %v1324
        %1341 = vst.msk [vmem:[%s317 + $0x38] sm:$0xff] %vm338, %v1325
        %1342 = vst.msk [vmem:[%s317 + $0x40] sm:$0xff] %vm338, %v1326
        %1343 = vst.msk [vmem:[%s317 + $0x48] sm:$0xff] %vm338, %v1327
        %1344 = vst.msk [vmem:[%s317 + $0x50] sm:$0xff] %vm338, %v1328
        %1345 = vst.msk [vmem:[%s317 + $0x58] sm:$0xff] %vm338, %v1329
        %1346 = vst.msk [vmem:[%s317 + $0x60] sm:$0xff] %vm338, %v1330
        %1347 = vst.msk [vmem:[%s317 + $0x68] sm:$0xff] %vm338, %v1331
        %1348 = vst.msk [vmem:[%s317 + $0x70] sm:$0xff] %vm338, %v1332
        %1349 = vst.msk [vmem:[%s317 + $0x78] sm:$0xff] %vm338, %v1333
        %p1350 = scmp.lt.s32.totalorder %s25, 1
        %s1351 = scalar_select %p1350, %s25, 1
        %s1352 = smul.addr %s1351, 16
        %s1353 = smul.addr %s1352, 8
        %s1354 = scalar_lea.vmem %s5, %s1353
        %s1355 = sand.u32 %s169, 1
        %s1356 = scalar_lea.sflag [#allocation5], %s1355
        %s1357 = sand.u32 %s169, 1
        %s1358 = smul.addr %s1357, 64
        %s1359 = scalar_lea.vmem [#allocation9], %s1358
        // Predicated region
        $region53: #{tpu_custom_call.1} parent=39 // pred_check
          %p1360 = pneg %p153
        $region54: #{tpu_custom_call.1} parent=39 // pred_check_branch
          %1362 = sbr.rel (%p1360) target = $region56
        $region55: #{tpu_custom_call.1} parent=39 // pred_region
          _
        $region56: #{tpu_custom_call.1} parent=39 // pred_fallthru
          _
        // Predicated region
        $region57: #{tpu_custom_call.1} parent=39 // pred_check
          %p1363 = pneg %p179
        $region58: #{tpu_custom_call.1} parent=39 // pred_check_branch
          %1365 = sbr.rel (%p1363) target = $region60
        $region59: #{tpu_custom_call.1} parent=39 // pred_region
          %1367 = vsyncadd %s1356, 0
          %s1368 = smul.addr %s25, 8
          %s1369 = smul.addr %s1368, 8
          %s1370 = scalar_lea.hbm %s6, %s1369
          %s1371 = sshll.u32 %s1359, 4
          %s1372 = int_to_ptr.vmem [resolvable:$true] %s1371
          %s1373 = sshll.u32 %s1370, 4
          %s1374 = int_to_ptr.hbm [resolvable:$true] %s1373
          %1379 = dma.vmem_to_hbm [thread:$0]  %s1372, 1024, %s1374, %s1356, 128, 128, 8
        $region60: #{tpu_custom_call.1} parent=39 // pred_fallthru
          _
      $region40: #{tpu_custom_call.1} parent=5 // pred_fallthru
        _
      %p1380 = scmp.le.s32.totalorder 2, %s20
      // Predicated region
      $region61: #{tpu_custom_call.1} parent=5 // pred_check
        %p1381 = pneg %p1380
      $region62: #{tpu_custom_call.1} parent=5 // pred_check_branch
        %1383 = sbr.rel (%p1381) target = $region64
      $region63: #{tpu_custom_call.1} parent=5 // pred_region
        %s1384 = ssub.s32 %s20, 2
        // Predicated region
        $region65: #{tpu_custom_call.1} parent=63 // pred_check
          %p1385 = pneg %p159
        $region66: #{tpu_custom_call.1} parent=63 // pred_check_branch
          %1387 = sbr.rel (%p1385) target = $region68
        $region67: #{tpu_custom_call.1} parent=63 // pred_region
          %p1388 = scmp.lt.s32.totalorder %s26, 1
          %s1389 = scalar_select %p1388, %s26, 1
          %s1390 = smul.addr %s1389, 16
          %s1391 = smul.addr %s1390, 8
          %s1392 = scalar_lea.vmem %s5, %s1391
        $region68: #{tpu_custom_call.1} parent=63 // pred_fallthru
          _
        // Predicated region
        $region69: #{tpu_custom_call.1} parent=63 // pred_check
          %p1393 = pneg %p185
        $region70: #{tpu_custom_call.1} parent=63 // pred_check_branch
          %1395 = sbr.rel (%p1393) target = $region72
        $region71: #{tpu_custom_call.1} parent=63 // pred_region
          %s1396 = sand.u32 %s170, 1
          %s1397 = scalar_lea.sflag [#allocation5], %s1396
          %s1398 = sand.u32 %s170, 1
          %s1399 = smul.addr %s1398, 64
          %s1400 = scalar_lea.vmem [#allocation9], %s1399
          %1402 = dma.done %s1397, 1024
        $region72: #{tpu_custom_call.1} parent=63 // pred_fallthru
          _
      $region64: #{tpu_custom_call.1} parent=5 // pred_fallthru
        _
    $region6: #{tpu_custom_call.1} parent=1 // loop_footer
      %s24 = sadd.s32 1, %s20
    $region7: #{tpu_custom_call.1} parent=1 // loop_footer_branch
      %19 = sbr.rel target = $region3
    $region8: #{tpu_custom_call.1} parent=1 // loop_exit
      _
    %1403 = vsyncpa [#allocation4], 1
    %s1404 = scalar_lea.sflag [#allocation4], 1
    %1405 = vsyncpa %s1404, 1
    %1406 = vsyncpa [#allocation7], 1
    %1407 = vsyncpa [#allocation5], 1
    %s1408 = scalar_lea.sflag [#allocation5], 1
    %1409 = vsyncpa %s1408, 1

</llo_original>
